<compile_context>
chip_gen: v7x
topology: tpu7x:2x2x1
jax: 0.10.0
libtpu: 0.0.40
codegen_flags: <defaults>
</compile_context>

<pallas_src>
import functools

import jax
import jax.numpy as jnp
from jax.experimental import pallas as pl
from jax.experimental.pallas import tpu as pltpu

# Logical head sizes (PyTorch module) and their MXU/lane-padded sizes.
FEAT = 1000          # densenet121 classifier output width
FEAT_PAD = 1024
HID = 100            # fc1 output width
HID_PAD = 128
OUT = 2              # fc2 output width (num classes)
OUT_PAD = 128


def _round_up(v, m):
    return (v + m - 1) // m * m


def _filternet_kernel(x_ref, wb_ref, bb_ref, w1_ref, b1_ref, w2_ref, b2_ref,
                      out_ref, acc_ref, *, inv_hw):
    """Grid = (batch tiles, spatial chunks).

    x_ref:   [TN, C, TS]     f32, NCHW order (spatial chunk in the lane dim)
    acc_ref: [TN, C]         f32 GAP accumulator (VMEM scratch)
    out_ref: [TN, OUT_PAD]   f32 lane-dense logits block
    """
    s = pl.program_id(1)

    @pl.when(s == 0)
    def _init():
        acc_ref[...] = jnp.zeros_like(acc_ref)

    # Partial global-average-pool: cross-lane (XLU) reduce of this spatial
    # chunk; channels land in the lanes of the [TN, C] accumulator.
    acc_ref[...] += jnp.sum(x_ref[...], axis=-1)

    @pl.when(s == pl.num_programs(1) - 1)
    def _finalize():
        feat = (acc_ref[...] * inv_hw).astype(jnp.bfloat16)          # [TN, C]

        # Backbone stand-in: linear C -> 1000 (zero-padded to 1024 lanes).
        backbone = jnp.dot(feat, wb_ref[...],
                           preferred_element_type=jnp.float32) + bb_ref[...]

        # fc1 -> ReLU
        h = jnp.dot(backbone.astype(jnp.bfloat16), w1_ref[...],
                    preferred_element_type=jnp.float32) + b1_ref[...]
        h = jnp.maximum(h, 0.0)

        # fc2 (output padded 2 -> 128 so the store is a full unmasked vst)
        logits = jnp.dot(h.astype(jnp.bfloat16), w2_ref[...],
                         preferred_element_type=jnp.float32) + b2_ref[...]
        out_ref[...] = logits.astype(out_ref.dtype)


def filternet_forward(x, params, *, batch_tile=8, spatial_tile=None):
    """x: [N, C, H, W] float32 (NCHW).  Returns logits [N, 2] float32."""
    n, c, h, w = x.shape
    hw = h * w

    # Free reshape; x is consumed in its native layout (no extra HBM pass).
    x3 = x.reshape(n, c, hw)

    # Batch tile: multiple of 8 so matmul M-dims / output stores stay sublane
    # aligned; batch is zero-padded only when it does not divide evenly.
    tn = min(batch_tile, _round_up(n, 8))
    n_pad = _round_up(n, tn)

    # Spatial tile: biggest lane-aligned chunk that keeps the double-buffered
    # x block inside a comfortable VMEM budget; prefer one that divides H*W
    # exactly so no spatial zero-padding (extra copy) is needed.
    if spatial_tile is None:
        spatial_tile = max(128, (8 << 20) // (tn * c * 4))
    ts = spatial_tile
    if ts >= hw:
        ts = hw
    else:
        ts = max(128, (ts // 128) * 128)
        t = ts
        while t > 128 and hw % t != 0:
            t -= 128
        if hw % t == 0:
            ts = t
    hw_pad = _round_up(hw, ts)

    if n_pad != n or hw_pad != hw:
        # Zero pad: does not change the GAP sum (kernel divides by true H*W).
        x3 = jnp.pad(x3, ((0, n_pad - n), (0, 0), (0, hw_pad - hw)))

    wb, bb, w1, b1, w2, b2 = (params["wb"], params["bb"], params["w1"],
                              params["b1"], params["w2"], params["b2"])

    grid = (n_pad // tn, hw_pad // ts)
    kernel = functools.partial(_filternet_kernel, inv_hw=1.0 / hw)

    # Rough VMEM budget (double-buffered x / out blocks, resident weights)
    # and a scheduler cost hint.
    weight_bytes = (c * FEAT_PAD + FEAT_PAD * HID_PAD + HID_PAD * OUT_PAD) * 2
    bias_bytes = (FEAT_PAD + HID_PAD + OUT_PAD) * 4
    est_vmem = (2 * tn * c * ts * 4           # x block (f32, double-buffered)
                + weight_bytes + bias_bytes   # resident weights / biases
                + 2 * tn * OUT_PAD * 4        # out block
                + tn * 128 * 4)               # acc scratch (lane-padded)
    vmem_limit = int(min(max(2 * est_vmem, 16 << 20), 32 << 20))

    cost = pl.CostEstimate(
        flops=int(n_pad * hw_pad * c
                  + 2 * n_pad * (c * FEAT_PAD + FEAT_PAD * HID_PAD
                                 + HID_PAD * OUT_PAD)),
        transcendentals=0,
        bytes_accessed=int(x3.size * 4 + weight_bytes + bias_bytes
                           + n_pad * OUT_PAD * 4),
    )

    out = pl.pallas_call(
        kernel,
        out_shape=jax.ShapeDtypeStruct((n_pad, OUT_PAD), jnp.float32),
        grid_spec=pltpu.PrefetchScalarGridSpec(
            num_scalar_prefetch=0,
            grid=grid,
            in_specs=[
                pl.BlockSpec((tn, c, ts), lambda b, s: (b, 0, s)),
                # Weights / biases: constant block index -> DMA'd once,
                # stay VMEM-resident across grid steps.
                pl.BlockSpec((c, FEAT_PAD), lambda b, s: (0, 0)),
                pl.BlockSpec((1, FEAT_PAD), lambda b, s: (0, 0)),
                pl.BlockSpec((FEAT_PAD, HID_PAD), lambda b, s: (0, 0)),
                pl.BlockSpec((1, HID_PAD), lambda b, s: (0, 0)),
                pl.BlockSpec((HID_PAD, OUT_PAD), lambda b, s: (0, 0)),
                pl.BlockSpec((1, OUT_PAD), lambda b, s: (0, 0)),
            ],
            out_specs=pl.BlockSpec((tn, OUT_PAD), lambda b, s: (b, 0)),
            scratch_shapes=[pltpu.VMEM((tn, c), jnp.float32)],
        ),
        compiler_params=pltpu.CompilerParams(
            dimension_semantics=("parallel", "arbitrary"),
            vmem_limit_bytes=vmem_limit,
        ),
        cost_estimate=cost,
    )(x3, wb, bb, w1, b1, w2, b2)

    return out[:n, :OUT]


def init_params(key, c):
    """Deterministic params.

    Linear weights stored pre-transposed (in_features, out_features) and
    zero-padded to MXU/lane-friendly widths; matmul operands in bf16 (f32
    accumulation inside the kernel), biases in f32.
    """
    k = jax.random.split(key, 6)
    scale = 0.02
    wb = scale * jax.random.normal(k[0], (c, FEAT), jnp.float32)
    bb = scale * jax.random.normal(k[1], (FEAT,), jnp.float32)
    w1 = scale * jax.random.normal(k[2], (FEAT, HID), jnp.float32)
    b1 = scale * jax.random.normal(k[3], (HID,), jnp.float32)
    w2 = scale * jax.random.normal(k[4], (HID, OUT), jnp.float32)
    b2 = scale * jax.random.normal(k[5], (OUT,), jnp.float32)

    def pad2(a, rows, cols):
        return jnp.pad(a, ((0, rows - a.shape[0]), (0, cols - a.shape[1])))

    return {
        "wb": pad2(wb, c, FEAT_PAD).astype(jnp.bfloat16),
        "bb": pad2(bb[None, :], 1, FEAT_PAD),
        "w1": pad2(w1, FEAT_PAD, HID_PAD).astype(jnp.bfloat16),
        "b1": pad2(b1[None, :], 1, HID_PAD),
        "w2": pad2(w2, HID_PAD, OUT_PAD).astype(jnp.bfloat16),
        "b2": pad2(b2[None, :], 1, OUT_PAD),
    }


def _reference(x, params):
    """Pure-JAX reference with the same bf16 operand / f32 accum policy."""
    n, c, h, w = x.shape
    feat = jnp.mean(x.reshape(n, c, h * w), axis=-1).astype(jnp.bfloat16)
    backbone = jnp.dot(feat, params["wb"],
                       preferred_element_type=jnp.float32) + params["bb"]
    h1 = jnp.dot(backbone.astype(jnp.bfloat16), params["w1"],
                 preferred_element_type=jnp.float32) + params["b1"]
    h1 = jnp.maximum(h1, 0.0)
    out = jnp.dot(h1.astype(jnp.bfloat16), params["w2"],
                  preferred_element_type=jnp.float32) + params["b2"]
    return out[:, :OUT]


if __name__ == "__main__":
    key = jax.random.PRNGKey(0)
    kx, kp = jax.random.split(key)

    # Small shapes consistent with the module's image-classifier interface.
    N, C, H, W = 2, 4, 16, 16
    x = jax.random.normal(kx, (N, C, H, W), jnp.float32)
    params = init_params(kp, C)

    # spatial_tile=128 so the toy shape exercises the multi-chunk GAP grid.
    out = filternet_forward(x, params, spatial_tile=128)
    out = jax.block_until_ready(out)
    assert out.shape == (N, OUT), out.shape

    ref = jax.block_until_ready(_reference(x, params))
    assert jnp.allclose(out, ref, atol=5e-2, rtol=5e-2)

    print("KERNEL_OK")
</pallas_src>

<mosaic_0001>
module attributes {stable_mosaic.version = 11 : i64} {
  func.func @_filternet_kernel(%arg0: i32, %arg1: i32, %arg2: memref<8x4x128xf32, #tpu.memory_space<vmem>>, %arg3: memref<4x1024xbf16, #tpu.memory_space<vmem>>, %arg4: memref<1x1024xf32, #tpu.memory_space<vmem>>, %arg5: memref<1024x128xbf16, #tpu.memory_space<vmem>>, %arg6: memref<1x128xf32, #tpu.memory_space<vmem>>, %arg7: memref<128x128xbf16, #tpu.memory_space<vmem>>, %arg8: memref<1x128xf32, #tpu.memory_space<vmem>>, %arg9: memref<8x128xf32, #tpu.memory_space<vmem>>, %arg10: memref<8x4xf32, #tpu.memory_space<vmem>>) attributes {dimension_semantics = [#tpu.dimension_semantics<parallel>, #tpu.dimension_semantics<arbitrary>], iteration_bounds = array<i64: 1, 2>, scalar_prefetch = 0 : i64, scratch_operands = 1 : i64, tpu.core_type = #tpu.core_type<tc>, window_params = [{transform_indices = @transform_0, window_bounds = array<i64: 8, 4, 128>}, {pipeline_mode = #tpu.pipeline_mode<synchronous>, transform_indices = @transform_1, window_bounds = array<i64: 4, 1024>}, {pipeline_mode = #tpu.pipeline_mode<synchronous>, transform_indices = @transform_2, window_bounds = array<i64: 1, 1024>}, {pipeline_mode = #tpu.pipeline_mode<synchronous>, transform_indices = @transform_3, window_bounds = array<i64: 1024, 128>}, {pipeline_mode = #tpu.pipeline_mode<synchronous>, transform_indices = @transform_4, window_bounds = array<i64: 1, 128>}, {pipeline_mode = #tpu.pipeline_mode<synchronous>, transform_indices = @transform_5, window_bounds = array<i64: 128, 128>}, {pipeline_mode = #tpu.pipeline_mode<synchronous>, transform_indices = @transform_6, window_bounds = array<i64: 1, 128>}, {transform_indices = @transform_7, window_bounds = array<i64: 8, 128>}]} {
    %c0_i32 = arith.constant 0 : i32
    %0 = arith.cmpi eq, %arg1, %c0_i32 : i32
    %1 = arith.extui %0 : i1 to i32
    %c0_i32_0 = arith.constant 0 : i32
    %2 = arith.cmpi ne, %1, %c0_i32_0 : i32
    scf.if %2 {
      %cst_8 = arith.constant 0.000000e+00 : f32
      %11 = vector.broadcast %cst_8 : f32 to vector<8x4xf32>
      %c0_9 = arith.constant 0 : index
      %c0_10 = arith.constant 0 : index
      %12 = vector.load %arg10[%c0_9, %c0_10] : memref<8x4xf32, #tpu.memory_space<vmem>>, vector<8x4xf32>
      tpu.vector_store %arg10[%c0_9, %c0_10], %11 {strides = array<i32>} : memref<8x4xf32, #tpu.memory_space<vmem>>, vector<8x4xf32>,
    } else {
    }
    %c0 = arith.constant 0 : index
    %c0_1 = arith.constant 0 : index
    %3 = vector.load %arg10[%c0, %c0_1] : memref<8x4xf32, #tpu.memory_space<vmem>>, vector<8x4xf32>
    %c0_2 = arith.constant 0 : index
    %c0_3 = arith.constant 0 : index
    %c0_4 = arith.constant 0 : index
    %4 = vector.load %arg2[%c0_2, %c0_3, %c0_4] : memref<8x4x128xf32, #tpu.memory_space<vmem>>, vector<8x4x128xf32>
    %cst = arith.constant dense<0.000000e+00> : vector<8x4xf32>
    %5 = vector.multi_reduction <add>, %4, %cst [2] : vector<8x4x128xf32> to vector<8x4xf32>
    %6 = arith.addf %3, %5 : vector<8x4xf32>
    %c0_5 = arith.constant 0 : index
    %c0_6 = arith.constant 0 : index
    %7 = vector.load %arg10[%c0_5, %c0_6] : memref<8x4xf32, #tpu.memory_space<vmem>>, vector<8x4xf32>
    tpu.vector_store %arg10[%c0_5, %c0_6], %6 {strides = array<i32>} : memref<8x4xf32, #tpu.memory_space<vmem>>, vector<8x4xf32>,
    %c1_i32 = arith.constant 1 : i32
    %8 = arith.cmpi eq, %arg1, %c1_i32 : i32
    %9 = arith.extui %8 : i1 to i32
    %c0_i32_7 = arith.constant 0 : i32
    %10 = arith.cmpi ne, %9, %c0_i32_7 : i32
    scf.if %10 {
      %c0_8 = arith.constant 0 : index
      %c0_9 = arith.constant 0 : index
      %11 = vector.load %arg10[%c0_8, %c0_9] : memref<8x4xf32, #tpu.memory_space<vmem>>, vector<8x4xf32>
      %cst_10 = arith.constant 3.906250e-03 : f32
      %12 = vector.broadcast %cst_10 : f32 to vector<8x4xf32>
      %13 = arith.mulf %11, %12 : vector<8x4xf32>
      %14 = arith.truncf %13 : vector<8x4xf32> to vector<8x4xbf16>
      %c0_11 = arith.constant 0 : index
      %c0_12 = arith.constant 0 : index
      %15 = vector.load %arg3[%c0_11, %c0_12] : memref<4x1024xbf16, #tpu.memory_space<vmem>>, vector<4x1024xbf16>
      %cst_13 = arith.constant dense<0.000000e+00> : vector<8x1024xf32>
      %16 = tpu.matmul %14, %15, %cst_13 {dimension_numbers = #tpu.dot_dimension_numbers<[1], [0], [0], [1], [0, 0, 1, 1], [], []>} : vector<8x4xbf16>, vector<4x1024xbf16>, vector<8x1024xf32> -> vector<8x1024xf32>
      %c0_14 = arith.constant 0 : index
      %c0_15 = arith.constant 0 : index
      %17 = vector.load %arg4[%c0_14, %c0_15] : memref<1x1024xf32, #tpu.memory_space<vmem>>, vector<1x1024xf32>
      %18 = vector.broadcast %17 : vector<1x1024xf32> to vector<8x1024xf32>
      %19 = arith.addf %16, %18 : vector<8x1024xf32>
      %20 = arith.truncf %19 : vector<8x1024xf32> to vector<8x1024xbf16>
      %c0_16 = arith.constant 0 : index
      %c0_17 = arith.constant 0 : index
      %21 = vector.load %arg5[%c0_16, %c0_17] : memref<1024x128xbf16, #tpu.memory_space<vmem>>, vector<1024x128xbf16>
      %cst_18 = arith.constant dense<0.000000e+00> : vector<8x128xf32>
      %22 = tpu.matmul %20, %21, %cst_18 {dimension_numbers = #tpu.dot_dimension_numbers<[1], [0], [0], [1], [0, 0, 1, 1], [], []>} : vector<8x1024xbf16>, vector<1024x128xbf16>, vector<8x128xf32> -> vector<8x128xf32>
      %c0_19 = arith.constant 0 : index
      %c0_20 = arith.constant 0 : index
      %23 = vector.load %arg6[%c0_19, %c0_20] : memref<1x128xf32, #tpu.memory_space<vmem>>, vector<1x128xf32>
      %24 = vector.broadcast %23 : vector<1x128xf32> to vector<8x128xf32>
      %25 = arith.addf %22, %24 : vector<8x128xf32>
      %cst_21 = arith.constant 0.000000e+00 : f32
      %26 = vector.broadcast %cst_21 : f32 to vector<8x128xf32>
      %27 = arith.maximumf %25, %26 : vector<8x128xf32>
      %28 = arith.truncf %27 : vector<8x128xf32> to vector<8x128xbf16>
      %c0_22 = arith.constant 0 : index
      %c0_23 = arith.constant 0 : index
      %29 = vector.load %arg7[%c0_22, %c0_23] : memref<128x128xbf16, #tpu.memory_space<vmem>>, vector<128x128xbf16>
      %cst_24 = arith.constant dense<0.000000e+00> : vector<8x128xf32>
      %30 = tpu.matmul %28, %29, %cst_24 {dimension_numbers = #tpu.dot_dimension_numbers<[1], [0], [0], [1], [0, 0, 1, 1], [], []>} : vector<8x128xbf16>, vector<128x128xbf16>, vector<8x128xf32> -> vector<8x128xf32>
      %c0_25 = arith.constant 0 : index
      %c0_26 = arith.constant 0 : index
      %31 = vector.load %arg8[%c0_25, %c0_26] : memref<1x128xf32, #tpu.memory_space<vmem>>, vector<1x128xf32>
      %32 = vector.broadcast %31 : vector<1x128xf32> to vector<8x128xf32>
      %33 = arith.addf %30, %32 : vector<8x128xf32>
      %c0_27 = arith.constant 0 : index
      %c0_28 = arith.constant 0 : index
      %34 = vector.load %arg9[%c0_27, %c0_28] : memref<8x128xf32, #tpu.memory_space<vmem>>, vector<8x128xf32>
      tpu.vector_store %arg9[%c0_27, %c0_28], %33 {strides = array<i32>} : memref<8x128xf32, #tpu.memory_space<vmem>>, vector<8x128xf32>,
    } else {
    }
    return
  }
  func.func @transform_0(%arg0: i32, %arg1: i32) -> (i32, i32, i32) {
    %c0_i32 = arith.constant 0 : i32
    %c0_i32_0 = arith.constant 0 : i32
    return %arg0, %c0_i32, %arg1 : i32, i32, i32
  }
  func.func @transform_1(%arg0: i32, %arg1: i32) -> (i32, i32) {
    %c0_i32 = arith.constant 0 : i32
    %c0_i32_0 = arith.constant 0 : i32
    %c0_i32_1 = arith.constant 0 : i32
    return %c0_i32, %c0_i32_0 : i32, i32
  }
  func.func @transform_2(%arg0: i32, %arg1: i32) -> (i32, i32) {
    %c0_i32 = arith.constant 0 : i32
    %c0_i32_0 = arith.constant 0 : i32
    %c0_i32_1 = arith.constant 0 : i32
    return %c0_i32, %c0_i32_0 : i32, i32
  }
  func.func @transform_3(%arg0: i32, %arg1: i32) -> (i32, i32) {
    %c0_i32 = arith.constant 0 : i32
    %c0_i32_0 = arith.constant 0 : i32
    %c0_i32_1 = arith.constant 0 : i32
    return %c0_i32, %c0_i32_0 : i32, i32
  }
  func.func @transform_4(%arg0: i32, %arg1: i32) -> (i32, i32) {
    %c0_i32 = arith.constant 0 : i32
    %c0_i32_0 = arith.constant 0 : i32
    %c0_i32_1 = arith.constant 0 : i32
    return %c0_i32, %c0_i32_0 : i32, i32
  }
  func.func @transform_5(%arg0: i32, %arg1: i32) -> (i32, i32) {
    %c0_i32 = arith.constant 0 : i32
    %c0_i32_0 = arith.constant 0 : i32
    %c0_i32_1 = arith.constant 0 : i32
    return %c0_i32, %c0_i32_0 : i32, i32
  }
  func.func @transform_6(%arg0: i32, %arg1: i32) -> (i32, i32) {
    %c0_i32 = arith.constant 0 : i32
    %c0_i32_0 = arith.constant 0 : i32
    %c0_i32_1 = arith.constant 0 : i32
    return %c0_i32, %c0_i32_0 : i32, i32
  }
  func.func @transform_7(%arg0: i32, %arg1: i32) -> (i32, i32) {
    %c0_i32 = arith.constant 0 : i32
    %c0_i32_0 = arith.constant 0 : i32
    return %arg0, %c0_i32 : i32, i32
  }
}

</mosaic_0001>

<llo_original>
// kernel: tpu_custom_call.1
$region0: #{tpu_custom_call.1}
  #allocation0 [shape = 'u32[]', space=smem, size = 0x4, offset = 0x4, fixed_abs, tag = 'smem constant byte address 0x4 - core index']
  #allocation1 [shape = 'u32[144,128]{1,0:T(1,128)}', space=vmem, size = 0x12000, scoped, tag = 'internal scratch']
  #allocation2 [shape = 'f32[8,4]{1,0:T(8,128)}', space=vmem, size = 0x1000, scoped, tag = 'scratch operand']
  %s0 = inlined_call_operand.hbm [shape: f32[8,4,256], index: 0, kind: input, shape index: {}]
  %s1 = inlined_call_operand.hbm [shape: bf16[4,1024], index: 1, kind: input, shape index: {}]
  %s2 = inlined_call_operand.hbm [shape: f32[1,1024], index: 2, kind: input, shape index: {}]
  %s3 = inlined_call_operand.hbm [shape: bf16[1024,128], index: 3, kind: input, shape index: {}]
  %s4 = inlined_call_operand.vmem [shape: f32[1,128], index: 4, kind: input, shape index: {}]
  %s5 = inlined_call_operand.hbm [shape: bf16[128,128], index: 5, kind: input, shape index: {}]
  %s6 = inlined_call_operand.vmem [shape: f32[1,128], index: 6, kind: input, shape index: {}]
  %s7 = inlined_call_operand.hbm [shape: f32[8,128], index: 7, kind: output, shape index: {}]
  %s8 = sld [smem:[#allocation0]]
  $region89: #{tpu_custom_call.1} parent=0
    _
  %s10 = ssub.s32 1, %s8
  %s11 = scalar_select 0, %s10, %s8
  $region1: #{tpu_custom_call.1} parent=0
    #allocation3 [shape = 'u8[32768]{0}', space=vmem, size = 0x8000, scoped, tag = 'input window, operand 0']
    #allocation4 [shape = 's32[2]{0}', space=sflag, size = 0x8, scoped, tag = 'scoped memory for tpu_custom_call.1']
    #allocation5 [shape = 's32[2]{0}', space=sflag, size = 0x8, scoped, tag = 'scoped memory for tpu_custom_call.1']
    #allocation6 [shape = 'u8[8192]{0}', space=vmem, size = 0x2000, scoped, tag = 'input window, operand 1, single buffered']
    #allocation7 [shape = 's32[1]{0}', space=sflag, size = 0x4, scoped, tag = 'scoped memory for tpu_custom_call.1']
    #allocation8 [shape = 'u8[4096]{0}', space=vmem, size = 0x1000, scoped, tag = 'input window, operand 2, single buffered']
    #allocation9 [shape = 'u8[262144]{0}', space=vmem, size = 0x40000, scoped, tag = 'input window, operand 3, single buffered']
    #allocation10 [shape = 's32[1]{0}', space=sflag, size = 0x4, scoped, tag = 'scoped memory for tpu_custom_call.1']
    #allocation11 [shape = 'u8[32768]{0}', space=vmem, size = 0x8000, scoped, tag = 'input window, operand 5, single buffered']
    #allocation12 [shape = 'u8[4096]{0}', space=vmem, size = 0x1000, scoped, tag = 'output window, operand 0, single buffered']
    %12 = vsyncpa [#allocation4], 0
    %s13 = scalar_lea.sflag [#allocation4], 1
    %14 = vsyncpa %s13, 0
    %15 = vsyncpa [#allocation7], 0
    %16 = vsyncpa [#allocation10], 0
    %17 = vsyncpa [#allocation5], 0
    loop: start=0, step=1, limit=4
    $region2: #{tpu_custom_call.1} parent=1 // loop_pre_header
      _
    $region3: #{tpu_custom_call.1} parent=1 // loop_header
      %s19 = sphi 0, %s23
      %p20 = scmp.ge.s32.totalorder %s19, 4
      %s26 = sphi 0, %s38
      %s27 = sphi 0, %s34
      %s28 = sphi 0, %s26
      %s29 = sphi 0, %s27
      %s30 = sphi 0, %s28
      %s31 = sphi 0, %s29
      %s43 = sphi 0, %s45
      %s46 = sphi 0, %s43
      %s47 = sphi 0, %s46
      %s63 = sphi 0, %s47
      %s67 = sphi 0, %s67
      %s69 = sphi 0, %s67
      %s70 = sphi 0, %s69
      %s84 = sphi 0, %s70
      %s88 = sphi 0, %s88
      %s90 = sphi 0, %s88
      %s91 = sphi 0, %s90
      %s105 = sphi 0, %s91
      %s109 = sphi 0, %s109
      %s111 = sphi 0, %s109
      %s112 = sphi 0, %s111
      %s126 = sphi 0, %s112
      %s130 = sphi 0, %s130
      %s132 = sphi 0, %s130
      %s133 = sphi 0, %s132
      %s147 = sphi 0, %s133
      %s151 = sphi 0, %s151
      %s153 = sphi 0, %s151
      %s154 = sphi 0, %s153
      %s168 = sphi 0, %s154
      %s172 = sphi 0, %s172
      %s174 = sphi 0, %s172
      %s175 = sphi 0, %s174
      %s189 = sphi 0, %s175
      %s195 = sphi 0, %s197
      %s198 = sphi 0, %s195
      %s199 = sphi 0, %s198
      %s215 = sphi 0, %s199
    $region4: #{tpu_custom_call.1} parent=1 // loop_header_branch
      %22 = sbr.rel (%p20) target = $region8
    $region5: #{tpu_custom_call.1} parent=1 // loop_body
      %s24 = ssub.s32 %s19, 1
      %s25 = ssub.s32 %s19, 2
      %s32 = sadd.s32 1, %s27
      %p33 = scmp.ge.s32.totalorder %s32, 2
      %s34 = scalar_select %p33, 0, %s32
      %s35 = sadd.s32 1, %s26
      %s36 = scalar_select %p33, %s35, %s26
      %p37 = scmp.ge.s32.totalorder %s36, 1
      %s38 = scalar_select %p37, 0, %s36
      %s39 = ssub.s32 %s26, %s38
      %s40 = ssub.s32 %s27, %s34
      %s41 = sor.u32 %s39, %s40
      %p42 = scmp.eq.s32.totalorder %s41, 0
      %s44 = sadd.s32 %s43, 1
      %s45 = scalar_select %p42, %s43, %s44
      %p48 = pneg %p42
      %p49 = scmp.eq.s32.totalorder %s19, 1
      %p50 = por %p48, %p49
      %p51 = scmp.ne.s32.totalorder %s43, %s46
      %p52 = scmp.eq.s32.totalorder %s19, 0
      %p53 = por %p51, %p52
      %p54 = scmp.ne.s32.totalorder %s43, %s46
      %p55 = scmp.eq.s32.totalorder %s24, 1
      %p56 = por %p54, %p55
      %p57 = scmp.ne.s32.totalorder %s46, %s47
      %p58 = scmp.eq.s32.totalorder %s24, 0
      %p59 = por %p57, %p58
      %p60 = scmp.ne.s32.totalorder %s46, %s47
      %p61 = scmp.eq.s32.totalorder %s25, 1
      %p62 = por %p60, %p61
      %p64 = scmp.ne.s32.totalorder %s47, %s63
      %p65 = scmp.eq.s32.totalorder %s25, 0
      %p66 = por %p64, %p65
      %s68 = sadd.s32 %s67, 1
      %p71 = scmp.eq.s32.totalorder %s19, 1
      %p72 = scmp.ne.s32.totalorder %s67, %s69
      %p73 = scmp.eq.s32.totalorder %s19, 0
      %p74 = por %p72, %p73
      %p75 = scmp.ne.s32.totalorder %s67, %s69
      %p76 = scmp.eq.s32.totalorder %s24, 1
      %p77 = por %p75, %p76
      %p78 = scmp.ne.s32.totalorder %s69, %s70
      %p79 = scmp.eq.s32.totalorder %s24, 0
      %p80 = por %p78, %p79
      %p81 = scmp.ne.s32.totalorder %s69, %s70
      %p82 = scmp.eq.s32.totalorder %s25, 1
      %p83 = por %p81, %p82
      %p85 = scmp.ne.s32.totalorder %s70, %s84
      %p86 = scmp.eq.s32.totalorder %s25, 0
      %p87 = por %p85, %p86
      %s89 = sadd.s32 %s88, 1
      %p92 = scmp.eq.s32.totalorder %s19, 1
      %p93 = scmp.ne.s32.totalorder %s88, %s90
      %p94 = scmp.eq.s32.totalorder %s19, 0
      %p95 = por %p93, %p94
      %p96 = scmp.ne.s32.totalorder %s88, %s90
      %p97 = scmp.eq.s32.totalorder %s24, 1
      %p98 = por %p96, %p97
      %p99 = scmp.ne.s32.totalorder %s90, %s91
      %p100 = scmp.eq.s32.totalorder %s24, 0
      %p101 = por %p99, %p100
      %p102 = scmp.ne.s32.totalorder %s90, %s91
      %p103 = scmp.eq.s32.totalorder %s25, 1
      %p104 = por %p102, %p103
      %p106 = scmp.ne.s32.totalorder %s91, %s105
      %p107 = scmp.eq.s32.totalorder %s25, 0
      %p108 = por %p106, %p107
      %s110 = sadd.s32 %s109, 1
      %p113 = scmp.eq.s32.totalorder %s19, 1
      %p114 = scmp.ne.s32.totalorder %s109, %s111
      %p115 = scmp.eq.s32.totalorder %s19, 0
      %p116 = por %p114, %p115
      %p117 = scmp.ne.s32.totalorder %s109, %s111
      %p118 = scmp.eq.s32.totalorder %s24, 1
      %p119 = por %p117, %p118
      %p120 = scmp.ne.s32.totalorder %s111, %s112
      %p121 = scmp.eq.s32.totalorder %s24, 0
      %p122 = por %p120, %p121
      %p123 = scmp.ne.s32.totalorder %s111, %s112
      %p124 = scmp.eq.s32.totalorder %s25, 1
      %p125 = por %p123, %p124
      %p127 = scmp.ne.s32.totalorder %s112, %s126
      %p128 = scmp.eq.s32.totalorder %s25, 0
      %p129 = por %p127, %p128
      %s131 = sadd.s32 %s130, 1
      %p134 = scmp.eq.s32.totalorder %s19, 1
      %p135 = scmp.ne.s32.totalorder %s130, %s132
      %p136 = scmp.eq.s32.totalorder %s19, 0
      %p137 = por %p135, %p136
      %p138 = scmp.ne.s32.totalorder %s130, %s132
      %p139 = scmp.eq.s32.totalorder %s24, 1
      %p140 = por %p138, %p139
      %p141 = scmp.ne.s32.totalorder %s132, %s133
      %p142 = scmp.eq.s32.totalorder %s24, 0
      %p143 = por %p141, %p142
      %p144 = scmp.ne.s32.totalorder %s132, %s133
      %p145 = scmp.eq.s32.totalorder %s25, 1
      %p146 = por %p144, %p145
      %p148 = scmp.ne.s32.totalorder %s133, %s147
      %p149 = scmp.eq.s32.totalorder %s25, 0
      %p150 = por %p148, %p149
      %s152 = sadd.s32 %s151, 1
      %p155 = scmp.eq.s32.totalorder %s19, 1
      %p156 = scmp.ne.s32.totalorder %s151, %s153
      %p157 = scmp.eq.s32.totalorder %s19, 0
      %p158 = por %p156, %p157
      %p159 = scmp.ne.s32.totalorder %s151, %s153
      %p160 = scmp.eq.s32.totalorder %s24, 1
      %p161 = por %p159, %p160
      %p162 = scmp.ne.s32.totalorder %s153, %s154
      %p163 = scmp.eq.s32.totalorder %s24, 0
      %p164 = por %p162, %p163
      %p165 = scmp.ne.s32.totalorder %s153, %s154
      %p166 = scmp.eq.s32.totalorder %s25, 1
      %p167 = por %p165, %p166
      %p169 = scmp.ne.s32.totalorder %s154, %s168
      %p170 = scmp.eq.s32.totalorder %s25, 0
      %p171 = por %p169, %p170
      %s173 = sadd.s32 %s172, 1
      %p176 = scmp.eq.s32.totalorder %s19, 1
      %p177 = scmp.ne.s32.totalorder %s172, %s174
      %p178 = scmp.eq.s32.totalorder %s19, 0
      %p179 = por %p177, %p178
      %p180 = scmp.ne.s32.totalorder %s172, %s174
      %p181 = scmp.eq.s32.totalorder %s24, 1
      %p182 = por %p180, %p181
      %p183 = scmp.ne.s32.totalorder %s174, %s175
      %p184 = scmp.eq.s32.totalorder %s24, 0
      %p185 = por %p183, %p184
      %p186 = scmp.ne.s32.totalorder %s174, %s175
      %p187 = scmp.eq.s32.totalorder %s25, 1
      %p188 = por %p186, %p187
      %p190 = scmp.ne.s32.totalorder %s175, %s189
      %p191 = scmp.eq.s32.totalorder %s25, 0
      %p192 = por %p190, %p191
      %s193 = ssub.s32 %s26, %s38
      %p194 = scmp.eq.s32.totalorder %s193, 0
      %s196 = sadd.s32 %s195, 1
      %s197 = scalar_select %p194, %s195, %s196
      %p200 = pneg %p194
      %p201 = scmp.eq.s32.totalorder %s19, 1
      %p202 = por %p200, %p201
      %p203 = scmp.ne.s32.totalorder %s195, %s198
      %p204 = scmp.eq.s32.totalorder %s19, 0
      %p205 = por %p203, %p204
      %p206 = scmp.ne.s32.totalorder %s195, %s198
      %p207 = scmp.eq.s32.totalorder %s24, 1
      %p208 = por %p206, %p207
      %p209 = scmp.ne.s32.totalorder %s198, %s199
      %p210 = scmp.eq.s32.totalorder %s24, 0
      %p211 = por %p209, %p210
      %p212 = scmp.ne.s32.totalorder %s198, %s199
      %p213 = scmp.eq.s32.totalorder %s25, 1
      %p214 = por %p212, %p213
      %p216 = scmp.ne.s32.totalorder %s199, %s215
      %p217 = scmp.eq.s32.totalorder %s25, 0
      %p218 = por %p216, %p217
      %p219 = scmp.le.s32.totalorder 1, %s19
      %p220 = scmp.lt.s32.totalorder %s19, 3
      %p221 = pnand %p219, %p220
      %p222 = pneg %p221
      // Predicated region
      $region9: #{tpu_custom_call.1} parent=5 // pred_check
        _
      $region10: #{tpu_custom_call.1} parent=5 // pred_check_branch
        %224 = sbr.rel (%p221) target = $region12
      $region11: #{tpu_custom_call.1} parent=5 // pred_region
        %s225 = ssub.s32 %s19, 1
        // Predicated region
        $region13: #{tpu_custom_call.1} parent=11 // pred_check
          %p226 = pneg %p80
        $region14: #{tpu_custom_call.1} parent=11 // pred_check_branch
          %228 = sbr.rel (%p226) target = $region16
        $region15: #{tpu_custom_call.1} parent=11 // pred_region
          %s230 = ssub.s32 256, 256
          %231 = vsyncadd [#allocation7], %s230
          %s233 = sshll.u32 [#allocation6], 4
          %s234 = int_to_ptr.vmem [resolvable:$true] %s233
          %236 = dma.hbm_to_vmem [thread:$0]  %s1, 256, %s234, [#allocation7]
        $region16: #{tpu_custom_call.1} parent=11 // pred_fallthru
          _
        // Predicated region
        $region17: #{tpu_custom_call.1} parent=11 // pred_check
          %p237 = pneg %p101
        $region18: #{tpu_custom_call.1} parent=11 // pred_check_branch
          %239 = sbr.rel (%p237) target = $region20
        $region19: #{tpu_custom_call.1} parent=11 // pred_region
          %s241 = ssub.s32 128, 128
          %242 = vsyncadd [#allocation7], %s241
          %s244 = sshll.u32 [#allocation8], 4
          %s245 = int_to_ptr.vmem [resolvable:$true] %s244
          %247 = dma.hbm_to_vmem [thread:$0]  %s2, 128, %s245, [#allocation7]
        $region20: #{tpu_custom_call.1} parent=11 // pred_fallthru
          _
        // Predicated region
        $region21: #{tpu_custom_call.1} parent=11 // pred_check
          %p248 = pneg %p122
        $region22: #{tpu_custom_call.1} parent=11 // pred_check_branch
          %250 = sbr.rel (%p248) target = $region24
        $region23: #{tpu_custom_call.1} parent=11 // pred_region
          %s252 = ssub.s32 8192, 8192
          %253 = vsyncadd [#allocation10], %s252
          %s254 = sshll.u32 [#allocation9], 4
          %s255 = int_to_ptr.vmem [resolvable:$true] %s254
          %260 = dma.hbm_to_vmem [thread:$0]  %s3, 8192, %s255, [#allocation10], 64, 64, 4
        $region24: #{tpu_custom_call.1} parent=11 // pred_fallthru
          _
        // Predicated region
        $region25: #{tpu_custom_call.1} parent=11 // pred_check
          %p261 = pneg %p143
        $region26: #{tpu_custom_call.1} parent=11 // pred_check_branch
          %263 = sbr.rel (%p261) target = $region28
        $region27: #{tpu_custom_call.1} parent=11 // pred_region
          _
        $region28: #{tpu_custom_call.1} parent=11 // pred_fallthru
          _
        // Predicated region
        $region29: #{tpu_custom_call.1} parent=11 // pred_check
          %p264 = pneg %p164
        $region30: #{tpu_custom_call.1} parent=11 // pred_check_branch
          %266 = sbr.rel (%p264) target = $region32
        $region31: #{tpu_custom_call.1} parent=11 // pred_region
          %s268 = ssub.s32 1024, 1024
          %269 = vsyncadd [#allocation10], %s268
          %s270 = sshll.u32 [#allocation11], 4
          %s271 = int_to_ptr.vmem [resolvable:$true] %s270
          %276 = dma.hbm_to_vmem [thread:$0]  %s5, 1024, %s271, [#allocation10], 64, 64, 4
        $region32: #{tpu_custom_call.1} parent=11 // pred_fallthru
          _
        // Predicated region
        $region33: #{tpu_custom_call.1} parent=11 // pred_check
          %p277 = pneg %p185
        $region34: #{tpu_custom_call.1} parent=11 // pred_check_branch
          %279 = sbr.rel (%p277) target = $region36
        $region35: #{tpu_custom_call.1} parent=11 // pred_region
          _
        $region36: #{tpu_custom_call.1} parent=11 // pred_fallthru
          _
      $region12: #{tpu_custom_call.1} parent=5 // pred_fallthru
        _
      %p280 = scmp.lt.s32.totalorder %s19, 2
      // Predicated region
      $region37: #{tpu_custom_call.1} parent=5 // pred_check
        %p281 = pneg %p280
      $region38: #{tpu_custom_call.1} parent=5 // pred_check_branch
        %283 = sbr.rel (%p281) target = $region40
      $region39: #{tpu_custom_call.1} parent=5 // pred_region
        // Predicated region
        $region41: #{tpu_custom_call.1} parent=39 // pred_check
          %p284 = pneg %p53
        $region42: #{tpu_custom_call.1} parent=39 // pred_check_branch
          %286 = sbr.rel (%p284) target = $region44
        $region43: #{tpu_custom_call.1} parent=39 // pred_region
          %s287 = sand.u32 %s43, 1
          %s288 = scalar_lea.sflag [#allocation4], %s287
          %s289 = sand.u32 %s43, 1
          %s290 = smul.addr %s289, 32
          %s291 = scalar_lea.vmem [#allocation3], %s290
          %s292 = smul.u32 8, %s26
          %s294 = ssub.s32 512, 512
          %295 = vsyncadd %s288, %s294
          %s296 = smul.addr %s292, 2
          %s297 = sadd.s32 %s27, %s296
          %s298 = smul.addr %s297, 64
          %s299 = scalar_lea.hbm %s0, %s298
          %s300 = sshll.u32 %s291, 4
          %s301 = int_to_ptr.vmem [resolvable:$true] %s300
          %306 = dma.hbm_to_vmem [thread:$0]  %s299, 512, %s301, %s288, 128, 64, 4
        $region44: #{tpu_custom_call.1} parent=39 // pred_fallthru
          _
      $region40: #{tpu_custom_call.1} parent=5 // pred_fallthru
        _
      %p307 = scmp.le.s32.totalorder 1, %s19
      %p308 = scmp.lt.s32.totalorder %s19, 3
      %p309 = pnand %p307, %p308
      %p310 = pneg %p309
      // Predicated region
      $region45: #{tpu_custom_call.1} parent=5 // pred_check
        _
      $region46: #{tpu_custom_call.1} parent=5 // pred_check_branch
        %312 = sbr.rel (%p309) target = $region48
      $region47: #{tpu_custom_call.1} parent=5 // pred_region
        %s313 = ssub.s32 %s19, 1
        %s314 = sand.u32 %s46, 1
        %s315 = scalar_lea.sflag [#allocation4], %s314
        %s316 = sand.u32 %s46, 1
        %s317 = smul.addr %s316, 32
        %s318 = scalar_lea.vmem [#allocation3], %s317
        // Predicated region
        $region49: #{tpu_custom_call.1} parent=47 // pred_check
          %p319 = pneg %p59
        $region50: #{tpu_custom_call.1} parent=47 // pred_check_branch
          %321 = sbr.rel (%p319) target = $region52
        $region51: #{tpu_custom_call.1} parent=47 // pred_region
          %322 = dma.done %s315, 512
        $region52: #{tpu_custom_call.1} parent=47 // pred_fallthru
          _
        // Predicated region
        $region53: #{tpu_custom_call.1} parent=47 // pred_check
          %p323 = pneg %p80
        $region54: #{tpu_custom_call.1} parent=47 // pred_check_branch
          %325 = sbr.rel (%p323) target = $region56
        $region55: #{tpu_custom_call.1} parent=47 // pred_region
          %326 = dma.done [#allocation7], 256
        $region56: #{tpu_custom_call.1} parent=47 // pred_fallthru
          _
        // Predicated region
        $region57: #{tpu_custom_call.1} parent=47 // pred_check
          %p327 = pneg %p101
        $region58: #{tpu_custom_call.1} parent=47 // pred_check_branch
          %329 = sbr.rel (%p327) target = $region60
        $region59: #{tpu_custom_call.1} parent=47 // pred_region
          %330 = dma.done [#allocation7], 128
        $region60: #{tpu_custom_call.1} parent=47 // pred_fallthru
          _
        // Predicated region
        $region61: #{tpu_custom_call.1} parent=47 // pred_check
          %p331 = pneg %p122
        $region62: #{tpu_custom_call.1} parent=47 // pred_check_branch
          %333 = sbr.rel (%p331) target = $region64
        $region63: #{tpu_custom_call.1} parent=47 // pred_region
          %334 = dma.done [#allocation10], 8192
        $region64: #{tpu_custom_call.1} parent=47 // pred_fallthru
          _
        // Predicated region
        $region65: #{tpu_custom_call.1} parent=47 // pred_check
          %p335 = pneg %p164
        $region66: #{tpu_custom_call.1} parent=47 // pred_check_branch
          %337 = sbr.rel (%p335) target = $region68
        $region67: #{tpu_custom_call.1} parent=47 // pred_region
          %338 = dma.done [#allocation10], 1024
        $region68: #{tpu_custom_call.1} parent=47 // pred_fallthru
          _
        %s339 = sand.u32 %s46, 1
        %s340 = scalar_lea.sflag [#allocation4], %s339
        %s341 = sand.u32 %s46, 1
        %s342 = smul.addr %s341, 32
        %s343 = scalar_lea.vmem [#allocation3], %s342
        %p344 = pneg %p59
        %p345 = pneg %p56
        %p346 = pneg %p80
        %p347 = pneg %p77
        %p348 = pneg %p101
        %p349 = pneg %p98
        %p350 = pneg %p122
        %p351 = pneg %p119
        %p352 = pneg %p143
        %p353 = pneg %p140
        %p354 = pneg %p164
        %p355 = pneg %p161
        %p356 = pneg %p185
        %p357 = pneg %p182
        %p358 = pneg %p211
        %p359 = pneg %p208
        %s360 = smul.u32 8, %s28
        %p362 = scmp.eq.s32.totalorder %s29, 0
        // Predicated region
        $region69: #{tpu_custom_call.1} parent=47 // pred_check
          %p363 = pneg %p362
        $region70: #{tpu_custom_call.1} parent=47 // pred_check_branch
          %365 = sbr.rel (%p363) target = $region72
        $region71: #{tpu_custom_call.1} parent=47 // pred_region
          %vm366 = vcmask 31744
          %367 = vst.msk [vmem:[#allocation2] sm:$0xff] %vm366, 0.0
        $region72: #{tpu_custom_call.1} parent=47 // pred_fallthru
          _
        %v368 = vld [vmem:[#allocation2] sm:$0xff]
        %v369 = vld [vmem:[%s318] sm:$0xf]
        %v370 = vld [vmem:[%s318 + $0x4] sm:$0xf]
        %v371 = vld [vmem:[%s318 + $0x8] sm:$0xf]
        %v372 = vld [vmem:[%s318 + $0xc] sm:$0xf]
        %v373 = vld [vmem:[%s318 + $0x10] sm:$0xf]
        %v374 = vld [vmem:[%s318 + $0x14] sm:$0xf]
        %v375 = vld [vmem:[%s318 + $0x18] sm:$0xf]
        %v376 = vld [vmem:[%s318 + $0x1c] sm:$0xf]
        %vm377 = vcmask 1043456
        %v378 = vsel %vm377, %v369, 0.0
        %379 = vadd.xlane.f32.xlu0 %v378
        %v380 = vpop.xlane.xlu0 %379
        %v381 = vsel %vm377, %v370, 0.0
        %382 = vadd.xlane.f32.xlu0 %v381
        %v383 = vpop.xlane.xlu0 %382
        %v384 = vsel %vm377, %v371, 0.0
        %385 = vadd.xlane.f32.xlu0 %v384
        %v386 = vpop.xlane.xlu0 %385
        %v387 = vsel %vm377, %v372, 0.0
        %388 = vadd.xlane.f32.xlu0 %v387
        %v389 = vpop.xlane.xlu0 %388
        %v390 = vsel %vm377, %v373, 0.0
        %391 = vadd.xlane.f32.xlu0 %v390
        %v392 = vpop.xlane.xlu0 %391
        %v393 = vsel %vm377, %v374, 0.0
        %394 = vadd.xlane.f32.xlu0 %v393
        %v395 = vpop.xlane.xlu0 %394
        %v396 = vsel %vm377, %v375, 0.0
        %397 = vadd.xlane.f32.xlu0 %v396
        %v398 = vpop.xlane.xlu0 %397
        %v399 = vsel %vm377, %v376, 0.0
        %400 = vadd.xlane.f32.xlu0 %v399
        %v401 = vpop.xlane.xlu0 %400
        %v410 = vlaneseq
        %v411 = vand.u32 %v410, 127
        %v412 = vlaneseq
        %v413 = vshrl.u32 %v412, 7
        %v414 = vsub.s32 %v411, %v413
        %v415 = vrot.slane %v380, %v414
        %v416 = vlaneseq
        %v417 = vshrl.u32 %v416, 7
        %v418 = vsub.s32 %v411, %v417
        %v419 = vrot.slane %v383, %v418
        %v420 = vlaneseq
        %v421 = vshrl.u32 %v420, 7
        %v422 = vsub.s32 %v411, %v421
        %v423 = vrot.slane %v386, %v422
        %v424 = vlaneseq
        %v425 = vshrl.u32 %v424, 7
        %v426 = vsub.s32 %v411, %v425
        %v427 = vrot.slane %v389, %v426
        %v428 = vlaneseq
        %v429 = vshrl.u32 %v428, 7
        %v430 = vsub.s32 %v411, %v429
        %v431 = vrot.slane %v392, %v430
        %v432 = vlaneseq
        %v433 = vshrl.u32 %v432, 7
        %v434 = vsub.s32 %v411, %v433
        %v435 = vrot.slane %v395, %v434
        %v436 = vlaneseq
        %v437 = vshrl.u32 %v436, 7
        %v438 = vsub.s32 %v411, %v437
        %v439 = vrot.slane %v398, %v438
        %v440 = vlaneseq
        %v441 = vshrl.u32 %v440, 7
        %v442 = vsub.s32 %v411, %v441
        %v443 = vrot.slane %v401, %v442
        %vm444 = vcmask 1041409
        %v445 = vsel %vm444, %v419, %v415
        %vm446 = vcmask 1042434
        %v447 = vsel %vm446, %v423, %v445
        %vm448 = vcmask 1043459
        %v449 = vsel %vm448, %v427, %v447
        %vm450 = vcmask 1044484
        %v451 = vsel %vm450, %v431, %v449
        %vm452 = vcmask 1045509
        %v453 = vsel %vm452, %v435, %v451
        %vm454 = vcmask 1046534
        %v455 = vsel %vm454, %v439, %v453
        %vm456 = vcmask 1047559
        %v457 = vsel %vm456, %v443, %v455
        %v459 = vadd.f32 %v368, %v457
        %vm460 = vcmask 31744
        %461 = vst.msk [vmem:[#allocation2] sm:$0xff] %vm460, %v459
        %p462 = scmp.eq.s32.totalorder %s29, 1
        // Predicated region
        $region73: #{tpu_custom_call.1} parent=47 // pred_check
          %p463 = pneg %p462
        $region74: #{tpu_custom_call.1} parent=47 // pred_check_branch
          %465 = sbr.rel (%p463) target = $region76
        $region75: #{tpu_custom_call.1} parent=47 // pred_region
          %v466 = vld [vmem:[#allocation2] sm:$0xff]
          %v467 = vmul.f32 %v466, 0.00390625
          %v468 = vpack.c.bf16 %v467, %v467
          %v469 = vld [vmem:[#allocation6] sm:$0xff]
          %v470 = vld [vmem:[#allocation6 + $0x8] sm:$0xff]
          %v471 = vld [vmem:[#allocation8] sm:$0xff]
          %v473 = vlaneseq
          %v474 = vshrl.u32 %v473, 7
          %v475 = vsub.s32 0, %v474
          %v476 = vrot.slane %v471, %v475
          %v477 = vlaneseq
          %v478 = vshrl.u32 %v477, 7
          %v479 = vsub.s32 1, %v478
          %v480 = vrot.slane %v471, %v479
          %v481 = vlaneseq
          %v482 = vshrl.u32 %v481, 7
          %v483 = vsub.s32 2, %v482
          %v484 = vrot.slane %v471, %v483
          %v485 = vlaneseq
          %v486 = vshrl.u32 %v485, 7
          %v487 = vsub.s32 3, %v486
          %v488 = vrot.slane %v471, %v487
          %v489 = vlaneseq
          %v490 = vshrl.u32 %v489, 7
          %v491 = vsub.s32 4, %v490
          %v492 = vrot.slane %v471, %v491
          %v493 = vlaneseq
          %v494 = vshrl.u32 %v493, 7
          %v495 = vsub.s32 5, %v494
          %v496 = vrot.slane %v471, %v495
          %v497 = vlaneseq
          %v498 = vshrl.u32 %v497, 7
          %v499 = vsub.s32 6, %v498
          %v500 = vrot.slane %v471, %v499
          %v501 = vlaneseq
          %v502 = vshrl.u32 %v501, 7
          %v503 = vsub.s32 7, %v502
          %v504 = vrot.slane %v471, %v503
          %v515 = vcombine.high %v469, %v469
          %v517 = vunpack.c.l.s4 1983009808
          %v518 = vunpack.c.0.s8 %v517
          %v519 = vlaneseq
          %v520 = vshrl.u32 %v519, 7
          %v521 = vsub.s32 %v518, %v520
          %v522 = vrot.slane %v469, %v521
          %v524 = vunpack.c.l.s4 1983009808
          %v525 = vunpack.c.0.s8 %v524
          %v526 = vlaneseq
          %v527 = vshrl.u32 %v526, 7
          %v528 = vsub.s32 %v525, %v527
          %v529 = vrot.slane %v515, %v528
          %v530 = vcombine.high %v522, %v522
          %v531 = vcombine.high %v529, %v529
          %v532 = vcombine.high %v470, %v470
          %v534 = vunpack.c.l.s4 1983009808
          %v535 = vunpack.c.0.s8 %v534
          %v536 = vlaneseq
          %v537 = vshrl.u32 %v536, 7
          %v538 = vsub.s32 %v535, %v537
          %v539 = vrot.slane %v470, %v538
          %v541 = vunpack.c.l.s4 1983009808
          %v542 = vunpack.c.0.s8 %v541
          %v543 = vlaneseq
          %v544 = vshrl.u32 %v543, 7
          %v545 = vsub.s32 %v542, %v544
          %v546 = vrot.slane %v532, %v545
          %v547 = vcombine.high %v539, %v539
          %v548 = vcombine.high %v546, %v546
          %v550 = vsel %vm460, %v468, 0
          %vm552 = vcmask 1041408
          %v554 = vsel %vm552, %v522, 0
          %v557 = vsel %vm552, %v530, 0
          %v560 = vsel %vm552, %v529, 0
          %v563 = vsel %vm552, %v531, 0
          %v566 = vsel %vm552, %v539, 0
          %v569 = vsel %vm552, %v547, 0
          %v572 = vsel %vm552, %v546, 0
          %v575 = vsel %vm552, %v548, 0
          %577 = vmatprep.subr.bf16.mxu0 %v557
          %578 = vmatpush1.bf16.msra.mxu0 %v554
          %579 = vmatprep.subr.bf16.mxu0 0
          %580 = vmatpush1.bf16.msra.mxu0 0
          %581 = vmatprep.subr.bf16.mxu0 0
          %582 = vmatpush1.bf16.msra.mxu0 0
          %583 = vmatprep.subr.bf16.mxu0 0
          %584 = vmatpush1.bf16.msra.mxu0 0
          %585 = vmatprep.subr.bf16.mxu0 0
          %586 = vmatpush1.bf16.msra.mxu0 0
          %587 = vmatprep.subr.bf16.mxu0 0
          %588 = vmatpush1.bf16.msra.mxu0 0
          %589 = vmatprep.subr.bf16.mxu0 0
          %590 = vmatpush1.bf16.msra.mxu0 0
          %591 = vmatprep.subr.bf16.mxu0 0
          %592 = vmatpush1.bf16.msra.mxu0 0
          %593 = vmatprep.subr.bf16.mxu0 0
          %594 = vmatpush1.bf16.msra.mxu0 0
          %595 = vmatprep.subr.bf16.mxu0 0
          %596 = vmatpush1.bf16.msra.mxu0 0
          %597 = vmatprep.subr.bf16.mxu0 0
          %598 = vmatpush1.bf16.msra.mxu0 0
          %599 = vmatprep.subr.bf16.mxu0 0
          %600 = vmatpush1.bf16.msra.mxu0 0
          %601 = vmatprep.subr.bf16.mxu0 0
          %602 = vmatpush1.bf16.msra.mxu0 0
          %603 = vmatprep.subr.bf16.mxu0 0
          %604 = vmatpush1.bf16.msra.mxu0 0
          %605 = vmatprep.subr.bf16.mxu0 0
          %606 = vmatpush1.bf16.msra.mxu0 0
          %607 = vmatprep.subr.bf16.mxu0 0
          %608 = vmatpush1.bf16.msra.mxu0 0
          %609 = vmatprep.mubr.bf16.mxu0 0
          %610 = vmatmul.mubr.bf16.gmra.mrb[0].mxu0 %v550
          %v611 = vpop.f32.mrb[0].mxu0
          %v612 = vadd.f32 %v476, %v611
          %v613 = vpop.f32.mrb[0].mxu0
          %v614 = vadd.f32 %v480, %v613
          %v615 = vpop.f32.mrb[0].mxu0
          %v616 = vpop.f32.mrb[0].mxu0
          %617 = vdwg.mxu0
          %618 = vmatprep.subr.bf16.mxu0 %v563
          %619 = vmatpush1.bf16.msra.mxu0 %v560
          %620 = vmatprep.subr.bf16.mxu0 0
          %621 = vmatpush1.bf16.msra.mxu0 0
          %622 = vmatprep.subr.bf16.mxu0 0
          %623 = vmatpush1.bf16.msra.mxu0 0
          %624 = vmatprep.subr.bf16.mxu0 0
          %625 = vmatpush1.bf16.msra.mxu0 0
          %626 = vmatprep.subr.bf16.mxu0 0
          %627 = vmatpush1.bf16.msra.mxu0 0
          %628 = vmatprep.subr.bf16.mxu0 0
          %629 = vmatpush1.bf16.msra.mxu0 0
          %630 = vmatprep.subr.bf16.mxu0 0
          %631 = vmatpush1.bf16.msra.mxu0 0
          %632 = vmatprep.subr.bf16.mxu0 0
          %633 = vmatpush1.bf16.msra.mxu0 0
          %634 = vmatprep.subr.bf16.mxu0 0
          %635 = vmatpush1.bf16.msra.mxu0 0
          %636 = vmatprep.subr.bf16.mxu0 0
          %637 = vmatpush1.bf16.msra.mxu0 0
          %638 = vmatprep.subr.bf16.mxu0 0
          %639 = vmatpush1.bf16.msra.mxu0 0
          %640 = vmatprep.subr.bf16.mxu0 0
          %641 = vmatpush1.bf16.msra.mxu0 0
          %642 = vmatprep.subr.bf16.mxu0 0
          %643 = vmatpush1.bf16.msra.mxu0 0
          %644 = vmatprep.subr.bf16.mxu0 0
          %645 = vmatpush1.bf16.msra.mxu0 0
          %646 = vmatprep.subr.bf16.mxu0 0
          %647 = vmatpush1.bf16.msra.mxu0 0
          %648 = vmatprep.subr.bf16.mxu0 0
          %649 = vmatpush1.bf16.msra.mxu0 0
          %650 = vmatprep.mubr.bf16.mxu0 0
          %651 = vmatmul.mubr.bf16.gmra.mrb[0].mxu0 %v550
          %v652 = vpop.f32.mrb[0].mxu0
          %v653 = vadd.f32 %v484, %v652
          %v654 = vpop.f32.mrb[0].mxu0
          %v655 = vadd.f32 %v488, %v654
          %v656 = vpop.f32.mrb[0].mxu0
          %v657 = vpop.f32.mrb[0].mxu0
          %658 = vdwg.mxu0
          %659 = vmatprep.subr.bf16.mxu0 %v569
          %660 = vmatpush1.bf16.msra.mxu0 %v566
          %661 = vmatprep.subr.bf16.mxu0 0
          %662 = vmatpush1.bf16.msra.mxu0 0
          %663 = vmatprep.subr.bf16.mxu0 0
          %664 = vmatpush1.bf16.msra.mxu0 0
          %665 = vmatprep.subr.bf16.mxu0 0
          %666 = vmatpush1.bf16.msra.mxu0 0
          %667 = vmatprep.subr.bf16.mxu0 0
          %668 = vmatpush1.bf16.msra.mxu0 0
          %669 = vmatprep.subr.bf16.mxu0 0
          %670 = vmatpush1.bf16.msra.mxu0 0
          %671 = vmatprep.subr.bf16.mxu0 0
          %672 = vmatpush1.bf16.msra.mxu0 0
          %673 = vmatprep.subr.bf16.mxu0 0
          %674 = vmatpush1.bf16.msra.mxu0 0
          %675 = vmatprep.subr.bf16.mxu0 0
          %676 = vmatpush1.bf16.msra.mxu0 0
          %677 = vmatprep.subr.bf16.mxu0 0
          %678 = vmatpush1.bf16.msra.mxu0 0
          %679 = vmatprep.subr.bf16.mxu0 0
          %680 = vmatpush1.bf16.msra.mxu0 0
          %681 = vmatprep.subr.bf16.mxu0 0
          %682 = vmatpush1.bf16.msra.mxu0 0
          %683 = vmatprep.subr.bf16.mxu0 0
          %684 = vmatpush1.bf16.msra.mxu0 0
          %685 = vmatprep.subr.bf16.mxu0 0
          %686 = vmatpush1.bf16.msra.mxu0 0
          %687 = vmatprep.subr.bf16.mxu0 0
          %688 = vmatpush1.bf16.msra.mxu0 0
          %689 = vmatprep.subr.bf16.mxu0 0
          %690 = vmatpush1.bf16.msra.mxu0 0
          %691 = vmatprep.mubr.bf16.mxu0 0
          %692 = vmatmul.mubr.bf16.gmra.mrb[0].mxu0 %v550
          %v693 = vpop.f32.mrb[0].mxu0
          %v694 = vadd.f32 %v492, %v693
          %v695 = vpop.f32.mrb[0].mxu0
          %v696 = vadd.f32 %v496, %v695
          %v697 = vpop.f32.mrb[0].mxu0
          %v698 = vpop.f32.mrb[0].mxu0
          %699 = vdwg.mxu0
          %700 = vmatprep.subr.bf16.mxu0 %v575
          %701 = vmatpush1.bf16.msra.mxu0 %v572
          %702 = vmatprep.subr.bf16.mxu0 0
          %703 = vmatpush1.bf16.msra.mxu0 0
          %704 = vmatprep.subr.bf16.mxu0 0
          %705 = vmatpush1.bf16.msra.mxu0 0
          %706 = vmatprep.subr.bf16.mxu0 0
          %707 = vmatpush1.bf16.msra.mxu0 0
          %708 = vmatprep.subr.bf16.mxu0 0
          %709 = vmatpush1.bf16.msra.mxu0 0
          %710 = vmatprep.subr.bf16.mxu0 0
          %711 = vmatpush1.bf16.msra.mxu0 0
          %712 = vmatprep.subr.bf16.mxu0 0
          %713 = vmatpush1.bf16.msra.mxu0 0
          %714 = vmatprep.subr.bf16.mxu0 0
          %715 = vmatpush1.bf16.msra.mxu0 0
          %716 = vmatprep.subr.bf16.mxu0 0
          %717 = vmatpush1.bf16.msra.mxu0 0
          %718 = vmatprep.subr.bf16.mxu0 0
          %719 = vmatpush1.bf16.msra.mxu0 0
          %720 = vmatprep.subr.bf16.mxu0 0
          %721 = vmatpush1.bf16.msra.mxu0 0
          %722 = vmatprep.subr.bf16.mxu0 0
          %723 = vmatpush1.bf16.msra.mxu0 0
          %724 = vmatprep.subr.bf16.mxu0 0
          %725 = vmatpush1.bf16.msra.mxu0 0
          %726 = vmatprep.subr.bf16.mxu0 0
          %727 = vmatpush1.bf16.msra.mxu0 0
          %728 = vmatprep.subr.bf16.mxu0 0
          %729 = vmatpush1.bf16.msra.mxu0 0
          %730 = vmatprep.subr.bf16.mxu0 0
          %731 = vmatpush1.bf16.msra.mxu0 0
          %732 = vmatprep.mubr.bf16.mxu0 0
          %733 = vmatmul.mubr.bf16.gmra.mrb[0].mxu0 %v550
          %v734 = vpop.f32.mrb[0].mxu0
          %v735 = vadd.f32 %v500, %v734
          %v736 = vpop.f32.mrb[0].mxu0
          %v737 = vadd.f32 %v504, %v736
          %v738 = vpop.f32.mrb[0].mxu0
          %v739 = vpop.f32.mrb[0].mxu0
          %740 = vdwg.mxu0
          %v741 = vpack.c.bf16 %v612, %v612
          %v742 = vpack.c.bf16 %v614, %v614
          %v743 = vpack.c.bf16 %v653, %v653
          %v744 = vpack.c.bf16 %v655, %v655
          %v745 = vpack.c.bf16 %v694, %v694
          %v746 = vpack.c.bf16 %v696, %v696
          %v747 = vpack.c.bf16 %v735, %v735
          %v748 = vpack.c.bf16 %v737, %v737
          %v749 = vld [vmem:[#allocation9] sm:$0xf]
          %v750 = vld [vmem:[#allocation9 + $0x4] sm:$0xf]
          %v751 = vld [vmem:[#allocation9 + $0x8] sm:$0xf]
          %v752 = vld [vmem:[#allocation9 + $0xc] sm:$0xf]
          %v753 = vld [vmem:[#allocation9 + $0x10] sm:$0xf]
          %v754 = vld [vmem:[#allocation9 + $0x14] sm:$0xf]
          %v755 = vld [vmem:[#allocation9 + $0x18] sm:$0xf]
          %v756 = vld [vmem:[#allocation9 + $0x1c] sm:$0xf]
          %v757 = vld [vmem:[#allocation9 + $0x20] sm:$0xf]
          %v758 = vld [vmem:[#allocation9 + $0x24] sm:$0xf]
          %v759 = vld [vmem:[#allocation9 + $0x28] sm:$0xf]
          %v760 = vld [vmem:[#allocation9 + $0x2c] sm:$0xf]
          %v761 = vld [vmem:[#allocation9 + $0x30] sm:$0xf]
          %v762 = vld [vmem:[#allocation9 + $0x34] sm:$0xf]
          %v763 = vld [vmem:[#allocation9 + $0x38] sm:$0xf]
          %v764 = vld [vmem:[#allocation9 + $0x3c] sm:$0xf]
          %v765 = vld [vmem:[#allocation9 + $0x40] sm:$0xf]
          %v766 = vld [vmem:[#allocation9 + $0x44] sm:$0xf]
          %v767 = vld [vmem:[#allocation9 + $0x48] sm:$0xf]
          %v768 = vld [vmem:[#allocation9 + $0x4c] sm:$0xf]
          %v769 = vld [vmem:[#allocation9 + $0x50] sm:$0xf]
          %v770 = vld [vmem:[#allocation9 + $0x54] sm:$0xf]
          %v771 = vld [vmem:[#allocation9 + $0x58] sm:$0xf]
          %v772 = vld [vmem:[#allocation9 + $0x5c] sm:$0xf]
          %v773 = vld [vmem:[#allocation9 + $0x60] sm:$0xf]
          %v774 = vld [vmem:[#allocation9 + $0x64] sm:$0xf]
          %v775 = vld [vmem:[#allocation9 + $0x68] sm:$0xf]
          %v776 = vld [vmem:[#allocation9 + $0x6c] sm:$0xf]
          %v777 = vld [vmem:[#allocation9 + $0x70] sm:$0xf]
          %v778 = vld [vmem:[#allocation9 + $0x74] sm:$0xf]
          %v779 = vld [vmem:[#allocation9 + $0x78] sm:$0xf]
          %v780 = vld [vmem:[#allocation9 + $0x7c] sm:$0xf]
          %v781 = vld [vmem:[#allocation9 + $0x80] sm:$0xf]
          %v782 = vld [vmem:[#allocation9 + $0x84] sm:$0xf]
          %v783 = vld [vmem:[#allocation9 + $0x88] sm:$0xf]
          %v784 = vld [vmem:[#allocation9 + $0x8c] sm:$0xf]
          %v785 = vld [vmem:[#allocation9 + $0x90] sm:$0xf]
          %v786 = vld [vmem:[#allocation9 + $0x94] sm:$0xf]
          %v787 = vld [vmem:[#allocation9 + $0x98] sm:$0xf]
          %v788 = vld [vmem:[#allocation9 + $0x9c] sm:$0xf]
          %v789 = vld [vmem:[#allocation9 + $0xa0] sm:$0xf]
          %v790 = vld [vmem:[#allocation9 + $0xa4] sm:$0xf]
          %v791 = vld [vmem:[#allocation9 + $0xa8] sm:$0xf]
          %v792 = vld [vmem:[#allocation9 + $0xac] sm:$0xf]
          %v793 = vld [vmem:[#allocation9 + $0xb0] sm:$0xf]
          %v794 = vld [vmem:[#allocation9 + $0xb4] sm:$0xf]
          %v795 = vld [vmem:[#allocation9 + $0xb8] sm:$0xf]
          %v796 = vld [vmem:[#allocation9 + $0xbc] sm:$0xf]
          %v797 = vld [vmem:[#allocation9 + $0xc0] sm:$0xf]
          %v798 = vld [vmem:[#allocation9 + $0xc4] sm:$0xf]
          %v799 = vld [vmem:[#allocation9 + $0xc8] sm:$0xf]
          %v800 = vld [vmem:[#allocation9 + $0xcc] sm:$0xf]
          %v801 = vld [vmem:[#allocation9 + $0xd0] sm:$0xf]
          %v802 = vld [vmem:[#allocation9 + $0xd4] sm:$0xf]
          %v803 = vld [vmem:[#allocation9 + $0xd8] sm:$0xf]
          %v804 = vld [vmem:[#allocation9 + $0xdc] sm:$0xf]
          %v805 = vld [vmem:[#allocation9 + $0xe0] sm:$0xf]
          %v806 = vld [vmem:[#allocation9 + $0xe4] sm:$0xf]
          %v807 = vld [vmem:[#allocation9 + $0xe8] sm:$0xf]
          %v808 = vld [vmem:[#allocation9 + $0xec] sm:$0xf]
          %v809 = vld [vmem:[#allocation9 + $0xf0] sm:$0xf]
          %v810 = vld [vmem:[#allocation9 + $0xf4] sm:$0xf]
          %v811 = vld [vmem:[#allocation9 + $0xf8] sm:$0xf]
          %v812 = vld [vmem:[#allocation9 + $0xfc] sm:$0xf]
          %v813 = vld [vmem:[#allocation9 + $0x100] sm:$0xf]
          %v814 = vld [vmem:[#allocation9 + $0x104] sm:$0xf]
          %v815 = vld [vmem:[#allocation9 + $0x108] sm:$0xf]
          %v816 = vld [vmem:[#allocation9 + $0x10c] sm:$0xf]
          %v817 = vld [vmem:[#allocation9 + $0x110] sm:$0xf]
          %v818 = vld [vmem:[#allocation9 + $0x114] sm:$0xf]
          %v819 = vld [vmem:[#allocation9 + $0x118] sm:$0xf]
          %v820 = vld [vmem:[#allocation9 + $0x11c] sm:$0xf]
          %v821 = vld [vmem:[#allocation9 + $0x120] sm:$0xf]
          %v822 = vld [vmem:[#allocation9 + $0x124] sm:$0xf]
          %v823 = vld [vmem:[#allocation9 + $0x128] sm:$0xf]
          %v824 = vld [vmem:[#allocation9 + $0x12c] sm:$0xf]
          %v825 = vld [vmem:[#allocation9 + $0x130] sm:$0xf]
          %v826 = vld [vmem:[#allocation9 + $0x134] sm:$0xf]
          %v827 = vld [vmem:[#allocation9 + $0x138] sm:$0xf]
          %v828 = vld [vmem:[#allocation9 + $0x13c] sm:$0xf]
          %v829 = vld [vmem:[#allocation9 + $0x140] sm:$0xf]
          %v830 = vld [vmem:[#allocation9 + $0x144] sm:$0xf]
          %v831 = vld [vmem:[#allocation9 + $0x148] sm:$0xf]
          %v832 = vld [vmem:[#allocation9 + $0x14c] sm:$0xf]
          %v833 = vld [vmem:[#allocation9 + $0x150] sm:$0xf]
          %v834 = vld [vmem:[#allocation9 + $0x154] sm:$0xf]
          %v835 = vld [vmem:[#allocation9 + $0x158] sm:$0xf]
          %v836 = vld [vmem:[#allocation9 + $0x15c] sm:$0xf]
          %v837 = vld [vmem:[#allocation9 + $0x160] sm:$0xf]
          %v838 = vld [vmem:[#allocation9 + $0x164] sm:$0xf]
          %v839 = vld [vmem:[#allocation9 + $0x168] sm:$0xf]
          %v840 = vld [vmem:[#allocation9 + $0x16c] sm:$0xf]
          %v841 = vld [vmem:[#allocation9 + $0x170] sm:$0xf]
          %v842 = vld [vmem:[#allocation9 + $0x174] sm:$0xf]
          %v843 = vld [vmem:[#allocation9 + $0x178] sm:$0xf]
          %v844 = vld [vmem:[#allocation9 + $0x17c] sm:$0xf]
          %v845 = vld [vmem:[#allocation9 + $0x180] sm:$0xf]
          %v846 = vld [vmem:[#allocation9 + $0x184] sm:$0xf]
          %v847 = vld [vmem:[#allocation9 + $0x188] sm:$0xf]
          %v848 = vld [vmem:[#allocation9 + $0x18c] sm:$0xf]
          %v849 = vld [vmem:[#allocation9 + $0x190] sm:$0xf]
          %v850 = vld [vmem:[#allocation9 + $0x194] sm:$0xf]
          %v851 = vld [vmem:[#allocation9 + $0x198] sm:$0xf]
          %v852 = vld [vmem:[#allocation9 + $0x19c] sm:$0xf]
          %v853 = vld [vmem:[#allocation9 + $0x1a0] sm:$0xf]
          %v854 = vld [vmem:[#allocation9 + $0x1a4] sm:$0xf]
          %v855 = vld [vmem:[#allocation9 + $0x1a8] sm:$0xf]
          %v856 = vld [vmem:[#allocation9 + $0x1ac] sm:$0xf]
          %v857 = vld [vmem:[#allocation9 + $0x1b0] sm:$0xf]
          %v858 = vld [vmem:[#allocation9 + $0x1b4] sm:$0xf]
          %v859 = vld [vmem:[#allocation9 + $0x1b8] sm:$0xf]
          %v860 = vld [vmem:[#allocation9 + $0x1bc] sm:$0xf]
          %v861 = vld [vmem:[#allocation9 + $0x1c0] sm:$0xf]
          %v862 = vld [vmem:[#allocation9 + $0x1c4] sm:$0xf]
          %v863 = vld [vmem:[#allocation9 + $0x1c8] sm:$0xf]
          %v864 = vld [vmem:[#allocation9 + $0x1cc] sm:$0xf]
          %v865 = vld [vmem:[#allocation9 + $0x1d0] sm:$0xf]
          %v866 = vld [vmem:[#allocation9 + $0x1d4] sm:$0xf]
          %v867 = vld [vmem:[#allocation9 + $0x1d8] sm:$0xf]
          %v868 = vld [vmem:[#allocation9 + $0x1dc] sm:$0xf]
          %v869 = vld [vmem:[#allocation9 + $0x1e0] sm:$0xf]
          %v870 = vld [vmem:[#allocation9 + $0x1e4] sm:$0xf]
          %v871 = vld [vmem:[#allocation9 + $0x1e8] sm:$0xf]
          %v872 = vld [vmem:[#allocation9 + $0x1ec] sm:$0xf]
          %v873 = vld [vmem:[#allocation9 + $0x1f0] sm:$0xf]
          %v874 = vld [vmem:[#allocation9 + $0x1f4] sm:$0xf]
          %v875 = vld [vmem:[#allocation9 + $0x1f8] sm:$0xf]
          %v876 = vld [vmem:[#allocation9 + $0x1fc] sm:$0xf]
          %v877 = vld [vmem:[%s4] sm:$0x1]
          %v879 = vlaneseq
          %v880 = vshrl.u32 %v879, 7
          %v881 = vsub.s32 0, %v880
          %v882 = vrot.slane %v877, %v881
          %v1012 = vunpack.c.l.b16 %v749
          %v1013 = vunpack.c.l.b16 %v750
          %v1014 = vunpack.c.l.b16 %v751
          %v1015 = vunpack.c.l.b16 %v752
          %v1016 = vunpack.c.l.b16 %v753
          %v1017 = vunpack.c.l.b16 %v754
          %v1018 = vunpack.c.l.b16 %v755
          %v1019 = vunpack.c.l.b16 %v756
          %v1020 = vunpack.c.l.b16 %v757
          %v1021 = vunpack.c.l.b16 %v758
          %v1022 = vunpack.c.l.b16 %v759
          %v1023 = vunpack.c.l.b16 %v760
          %v1024 = vunpack.c.l.b16 %v761
          %v1025 = vunpack.c.l.b16 %v762
          %v1026 = vunpack.c.l.b16 %v763
          %v1027 = vunpack.c.l.b16 %v764
          %v1028 = vunpack.c.l.b16 %v765
          %v1029 = vunpack.c.l.b16 %v766
          %v1030 = vunpack.c.l.b16 %v767
          %v1031 = vunpack.c.l.b16 %v768
          %v1032 = vunpack.c.l.b16 %v769
          %v1033 = vunpack.c.l.b16 %v770
          %v1034 = vunpack.c.l.b16 %v771
          %v1035 = vunpack.c.l.b16 %v772
          %v1036 = vunpack.c.l.b16 %v773
          %v1037 = vunpack.c.l.b16 %v774
          %v1038 = vunpack.c.l.b16 %v775
          %v1039 = vunpack.c.l.b16 %v776
          %v1040 = vunpack.c.l.b16 %v777
          %v1041 = vunpack.c.l.b16 %v778
          %v1042 = vunpack.c.l.b16 %v779
          %v1043 = vunpack.c.l.b16 %v780
          %v1044 = vunpack.c.l.b16 %v781
          %v1045 = vunpack.c.l.b16 %v782
          %v1046 = vunpack.c.l.b16 %v783
          %v1047 = vunpack.c.l.b16 %v784
          %v1048 = vunpack.c.l.b16 %v785
          %v1049 = vunpack.c.l.b16 %v786
          %v1050 = vunpack.c.l.b16 %v787
          %v1051 = vunpack.c.l.b16 %v788
          %v1052 = vunpack.c.l.b16 %v789
          %v1053 = vunpack.c.l.b16 %v790
          %v1054 = vunpack.c.l.b16 %v791
          %v1055 = vunpack.c.l.b16 %v792
          %v1056 = vunpack.c.l.b16 %v793
          %v1057 = vunpack.c.l.b16 %v794
          %v1058 = vunpack.c.l.b16 %v795
          %v1059 = vunpack.c.l.b16 %v796
          %v1060 = vunpack.c.l.b16 %v797
          %v1061 = vunpack.c.l.b16 %v798
          %v1062 = vunpack.c.l.b16 %v799
          %v1063 = vunpack.c.l.b16 %v800
          %v1064 = vunpack.c.l.b16 %v801
          %v1065 = vunpack.c.l.b16 %v802
          %v1066 = vunpack.c.l.b16 %v803
          %v1067 = vunpack.c.l.b16 %v804
          %v1068 = vunpack.c.l.b16 %v805
          %v1069 = vunpack.c.l.b16 %v806
          %v1070 = vunpack.c.l.b16 %v807
          %v1071 = vunpack.c.l.b16 %v808
          %v1072 = vunpack.c.l.b16 %v809
          %v1073 = vunpack.c.l.b16 %v810
          %v1074 = vunpack.c.l.b16 %v811
          %v1075 = vunpack.c.l.b16 %v812
          %v1076 = vunpack.c.l.b16 %v813
          %v1077 = vunpack.c.l.b16 %v814
          %v1078 = vunpack.c.l.b16 %v815
          %v1079 = vunpack.c.l.b16 %v816
          %v1080 = vunpack.c.l.b16 %v817
          %v1081 = vunpack.c.l.b16 %v818
          %v1082 = vunpack.c.l.b16 %v819
          %v1083 = vunpack.c.l.b16 %v820
          %v1084 = vunpack.c.l.b16 %v821
          %v1085 = vunpack.c.l.b16 %v822
          %v1086 = vunpack.c.l.b16 %v823
          %v1087 = vunpack.c.l.b16 %v824
          %v1088 = vunpack.c.l.b16 %v825
          %v1089 = vunpack.c.l.b16 %v826
          %v1090 = vunpack.c.l.b16 %v827
          %v1091 = vunpack.c.l.b16 %v828
          %v1092 = vunpack.c.l.b16 %v829
          %v1093 = vunpack.c.l.b16 %v830
          %v1094 = vunpack.c.l.b16 %v831
          %v1095 = vunpack.c.l.b16 %v832
          %v1096 = vunpack.c.l.b16 %v833
          %v1097 = vunpack.c.l.b16 %v834
          %v1098 = vunpack.c.l.b16 %v835
          %v1099 = vunpack.c.l.b16 %v836
          %v1100 = vunpack.c.l.b16 %v837
          %v1101 = vunpack.c.l.b16 %v838
          %v1102 = vunpack.c.l.b16 %v839
          %v1103 = vunpack.c.l.b16 %v840
          %v1104 = vunpack.c.l.b16 %v841
          %v1105 = vunpack.c.l.b16 %v842
          %v1106 = vunpack.c.l.b16 %v843
          %v1107 = vunpack.c.l.b16 %v844
          %v1108 = vunpack.c.l.b16 %v845
          %v1109 = vunpack.c.l.b16 %v846
          %v1110 = vunpack.c.l.b16 %v847
          %v1111 = vunpack.c.l.b16 %v848
          %v1112 = vunpack.c.l.b16 %v849
          %v1113 = vunpack.c.l.b16 %v850
          %v1114 = vunpack.c.l.b16 %v851
          %v1115 = vunpack.c.l.b16 %v852
          %v1116 = vunpack.c.l.b16 %v853
          %v1117 = vunpack.c.l.b16 %v854
          %v1118 = vunpack.c.l.b16 %v855
          %v1119 = vunpack.c.l.b16 %v856
          %v1120 = vunpack.c.l.b16 %v857
          %v1121 = vunpack.c.l.b16 %v858
          %v1122 = vunpack.c.l.b16 %v859
          %v1123 = vunpack.c.l.b16 %v860
          %v1124 = vunpack.c.l.b16 %v861
          %v1125 = vunpack.c.l.b16 %v862
          %v1126 = vunpack.c.l.b16 %v863
          %v1127 = vunpack.c.l.b16 %v864
          %v1128 = vunpack.c.l.b16 %v865
          %v1129 = vunpack.c.l.b16 %v866
          %v1130 = vunpack.c.l.b16 %v867
          %v1131 = vunpack.c.l.b16 %v868
          %v1132 = vunpack.c.l.b16 %v869
          %v1133 = vunpack.c.l.b16 %v870
          %v1134 = vunpack.c.l.b16 %v871
          %v1135 = vunpack.c.l.b16 %v872
          %v1136 = vunpack.c.l.b16 %v873
          %v1137 = vunpack.c.l.b16 %v874
          %v1138 = vunpack.c.l.b16 %v875
          %v1139 = vunpack.c.l.b16 %v876
          %v1140 = vpack.c.b16 %v1013, %v1012
          %v1141 = vpack.c.b16 %v1015, %v1014
          %v1142 = vpack.c.b16 %v1017, %v1016
          %v1143 = vpack.c.b16 %v1019, %v1018
          %v1144 = vpack.c.b16 %v1021, %v1020
          %v1145 = vpack.c.b16 %v1023, %v1022
          %v1146 = vpack.c.b16 %v1025, %v1024
          %v1147 = vpack.c.b16 %v1027, %v1026
          %v1148 = vpack.c.b16 %v1029, %v1028
          %v1149 = vpack.c.b16 %v1031, %v1030
          %v1150 = vpack.c.b16 %v1033, %v1032
          %v1151 = vpack.c.b16 %v1035, %v1034
          %v1152 = vpack.c.b16 %v1037, %v1036
          %v1153 = vpack.c.b16 %v1039, %v1038
          %v1154 = vpack.c.b16 %v1041, %v1040
          %v1155 = vpack.c.b16 %v1043, %v1042
          %v1156 = vpack.c.b16 %v1045, %v1044
          %v1157 = vpack.c.b16 %v1047, %v1046
          %v1158 = vpack.c.b16 %v1049, %v1048
          %v1159 = vpack.c.b16 %v1051, %v1050
          %v1160 = vpack.c.b16 %v1053, %v1052
          %v1161 = vpack.c.b16 %v1055, %v1054
          %v1162 = vpack.c.b16 %v1057, %v1056
          %v1163 = vpack.c.b16 %v1059, %v1058
          %v1164 = vpack.c.b16 %v1061, %v1060
          %v1165 = vpack.c.b16 %v1063, %v1062
          %v1166 = vpack.c.b16 %v1065, %v1064
          %v1167 = vpack.c.b16 %v1067, %v1066
          %v1168 = vpack.c.b16 %v1069, %v1068
          %v1169 = vpack.c.b16 %v1071, %v1070
          %v1170 = vpack.c.b16 %v1073, %v1072
          %v1171 = vpack.c.b16 %v1075, %v1074
          %v1172 = vpack.c.b16 %v1077, %v1076
          %v1173 = vpack.c.b16 %v1079, %v1078
          %v1174 = vpack.c.b16 %v1081, %v1080
          %v1175 = vpack.c.b16 %v1083, %v1082
          %v1176 = vpack.c.b16 %v1085, %v1084
          %v1177 = vpack.c.b16 %v1087, %v1086
          %v1178 = vpack.c.b16 %v1089, %v1088
          %v1179 = vpack.c.b16 %v1091, %v1090
          %v1180 = vpack.c.b16 %v1093, %v1092
          %v1181 = vpack.c.b16 %v1095, %v1094
          %v1182 = vpack.c.b16 %v1097, %v1096
          %v1183 = vpack.c.b16 %v1099, %v1098
          %v1184 = vpack.c.b16 %v1101, %v1100
          %v1185 = vpack.c.b16 %v1103, %v1102
          %v1186 = vpack.c.b16 %v1105, %v1104
          %v1187 = vpack.c.b16 %v1107, %v1106
          %v1188 = vpack.c.b16 %v1109, %v1108
          %v1189 = vpack.c.b16 %v1111, %v1110
          %v1190 = vpack.c.b16 %v1113, %v1112
          %v1191 = vpack.c.b16 %v1115, %v1114
          %v1192 = vpack.c.b16 %v1117, %v1116
          %v1193 = vpack.c.b16 %v1119, %v1118
          %v1194 = vpack.c.b16 %v1121, %v1120
          %v1195 = vpack.c.b16 %v1123, %v1122
          %v1196 = vpack.c.b16 %v1125, %v1124
          %v1197 = vpack.c.b16 %v1127, %v1126
          %v1198 = vpack.c.b16 %v1129, %v1128
          %v1199 = vpack.c.b16 %v1131, %v1130
          %v1200 = vpack.c.b16 %v1133, %v1132
          %v1201 = vpack.c.b16 %v1135, %v1134
          %v1202 = vpack.c.b16 %v1137, %v1136
          %v1203 = vpack.c.b16 %v1139, %v1138
          %1268 = vmatprep.subr.bf16.mxu0 0
          %1269 = vmatpush1.bf16.msra.mxu0 %v1140
          %1270 = vmatprep.subr.bf16.mxu0 0
          %1271 = vmatpush1.bf16.msra.mxu0 %v1141
          %1272 = vmatprep.subr.bf16.mxu0 0
          %1273 = vmatpush1.bf16.msra.mxu0 %v1142
          %1274 = vmatprep.subr.bf16.mxu0 0
          %1275 = vmatpush1.bf16.msra.mxu0 %v1143
          %1276 = vmatprep.subr.bf16.mxu0 0
          %1277 = vmatpush1.bf16.msra.mxu0 %v1144
          %1278 = vmatprep.subr.bf16.mxu0 0
          %1279 = vmatpush1.bf16.msra.mxu0 %v1145
          %1280 = vmatprep.subr.bf16.mxu0 0
          %1281 = vmatpush1.bf16.msra.mxu0 %v1146
          %1282 = vmatprep.subr.bf16.mxu0 0
          %1283 = vmatpush1.bf16.msra.mxu0 %v1147
          %1284 = vmatprep.subr.bf16.mxu0 0
          %1285 = vmatpush1.bf16.msra.mxu0 %v1148
          %1286 = vmatprep.subr.bf16.mxu0 0
          %1287 = vmatpush1.bf16.msra.mxu0 %v1149
          %1288 = vmatprep.subr.bf16.mxu0 0
          %1289 = vmatpush1.bf16.msra.mxu0 %v1150
          %1290 = vmatprep.subr.bf16.mxu0 0
          %1291 = vmatpush1.bf16.msra.mxu0 %v1151
          %1292 = vmatprep.subr.bf16.mxu0 0
          %1293 = vmatpush1.bf16.msra.mxu0 %v1152
          %1294 = vmatprep.subr.bf16.mxu0 0
          %1295 = vmatpush1.bf16.msra.mxu0 %v1153
          %1296 = vmatprep.subr.bf16.mxu0 0
          %1297 = vmatpush1.bf16.msra.mxu0 %v1154
          %1298 = vmatprep.subr.bf16.mxu0 0
          %1299 = vmatpush1.bf16.msra.mxu0 %v1155
          %1300 = vmatprep.mubr.bf16.mxu0 %v742
          %1301 = vmatmul.mubr.bf16.gmra.mrb[0].mxu0 %v741
          %v1302 = vpop.f32.mrb[0].mxu0
          %v1303 = vadd.f32 %v882, %v1302
          %v1304 = vpop.f32.mrb[0].mxu0
          %v1305 = vpop.f32.mrb[0].mxu0
          %v1306 = vpop.f32.mrb[0].mxu0
          %1307 = vdwg.mxu0
          %1308 = vmatprep.subr.bf16.mxu0 0
          %1309 = vmatpush1.bf16.msra.mxu0 %v1156
          %1310 = vmatprep.subr.bf16.mxu0 0
          %1311 = vmatpush1.bf16.msra.mxu0 %v1157
          %1312 = vmatprep.subr.bf16.mxu0 0
          %1313 = vmatpush1.bf16.msra.mxu0 %v1158
          %1314 = vmatprep.subr.bf16.mxu0 0
          %1315 = vmatpush1.bf16.msra.mxu0 %v1159
          %1316 = vmatprep.subr.bf16.mxu0 0
          %1317 = vmatpush1.bf16.msra.mxu0 %v1160
          %1318 = vmatprep.subr.bf16.mxu0 0
          %1319 = vmatpush1.bf16.msra.mxu0 %v1161
          %1320 = vmatprep.subr.bf16.mxu0 0
          %1321 = vmatpush1.bf16.msra.mxu0 %v1162
          %1322 = vmatprep.subr.bf16.mxu0 0
          %1323 = vmatpush1.bf16.msra.mxu0 %v1163
          %1324 = vmatprep.subr.bf16.mxu0 0
          %1325 = vmatpush1.bf16.msra.mxu0 %v1164
          %1326 = vmatprep.subr.bf16.mxu0 0
          %1327 = vmatpush1.bf16.msra.mxu0 %v1165
          %1328 = vmatprep.subr.bf16.mxu0 0
          %1329 = vmatpush1.bf16.msra.mxu0 %v1166
          %1330 = vmatprep.subr.bf16.mxu0 0
          %1331 = vmatpush1.bf16.msra.mxu0 %v1167
          %1332 = vmatprep.subr.bf16.mxu0 0
          %1333 = vmatpush1.bf16.msra.mxu0 %v1168
          %1334 = vmatprep.subr.bf16.mxu0 0
          %1335 = vmatpush1.bf16.msra.mxu0 %v1169
          %1336 = vmatprep.subr.bf16.mxu0 0
          %1337 = vmatpush1.bf16.msra.mxu0 %v1170
          %1338 = vmatprep.subr.bf16.mxu0 0
          %1339 = vmatpush1.bf16.msra.mxu0 %v1171
          %1340 = vmatprep.mubr.bf16.mxu0 %v744
          %1341 = vmatmul.mubr.bf16.gmra.mrb[0].mxu0 %v743
          %v1342 = vpop.f32.mrb[0].mxu0
          %v1343 = vadd.f32 %v1303, %v1342
          %v1344 = vpop.f32.mrb[0].mxu0
          %v1345 = vpop.f32.mrb[0].mxu0
          %v1346 = vpop.f32.mrb[0].mxu0
          %1347 = vdwg.mxu0
          %1348 = vmatprep.subr.bf16.mxu0 0
          %1349 = vmatpush1.bf16.msra.mxu0 %v1172
          %1350 = vmatprep.subr.bf16.mxu0 0
          %1351 = vmatpush1.bf16.msra.mxu0 %v1173
          %1352 = vmatprep.subr.bf16.mxu0 0
          %1353 = vmatpush1.bf16.msra.mxu0 %v1174
          %1354 = vmatprep.subr.bf16.mxu0 0
          %1355 = vmatpush1.bf16.msra.mxu0 %v1175
          %1356 = vmatprep.subr.bf16.mxu0 0
          %1357 = vmatpush1.bf16.msra.mxu0 %v1176
          %1358 = vmatprep.subr.bf16.mxu0 0
          %1359 = vmatpush1.bf16.msra.mxu0 %v1177
          %1360 = vmatprep.subr.bf16.mxu0 0
          %1361 = vmatpush1.bf16.msra.mxu0 %v1178
          %1362 = vmatprep.subr.bf16.mxu0 0
          %1363 = vmatpush1.bf16.msra.mxu0 %v1179
          %1364 = vmatprep.subr.bf16.mxu0 0
          %1365 = vmatpush1.bf16.msra.mxu0 %v1180
          %1366 = vmatprep.subr.bf16.mxu0 0
          %1367 = vmatpush1.bf16.msra.mxu0 %v1181
          %1368 = vmatprep.subr.bf16.mxu0 0
          %1369 = vmatpush1.bf16.msra.mxu0 %v1182
          %1370 = vmatprep.subr.bf16.mxu0 0
          %1371 = vmatpush1.bf16.msra.mxu0 %v1183
          %1372 = vmatprep.subr.bf16.mxu0 0
          %1373 = vmatpush1.bf16.msra.mxu0 %v1184
          %1374 = vmatprep.subr.bf16.mxu0 0
          %1375 = vmatpush1.bf16.msra.mxu0 %v1185
          %1376 = vmatprep.subr.bf16.mxu0 0
          %1377 = vmatpush1.bf16.msra.mxu0 %v1186
          %1378 = vmatprep.subr.bf16.mxu0 0
          %1379 = vmatpush1.bf16.msra.mxu0 %v1187
          %1380 = vmatprep.mubr.bf16.mxu0 %v746
          %1381 = vmatmul.mubr.bf16.gmra.mrb[0].mxu0 %v745
          %v1382 = vpop.f32.mrb[0].mxu0
          %v1383 = vadd.f32 %v1343, %v1382
          %v1384 = vpop.f32.mrb[0].mxu0
          %v1385 = vpop.f32.mrb[0].mxu0
          %v1386 = vpop.f32.mrb[0].mxu0
          %1387 = vdwg.mxu0
          %1388 = vmatprep.subr.bf16.mxu0 0
          %1389 = vmatpush1.bf16.msra.mxu0 %v1188
          %1390 = vmatprep.subr.bf16.mxu0 0
          %1391 = vmatpush1.bf16.msra.mxu0 %v1189
          %1392 = vmatprep.subr.bf16.mxu0 0
          %1393 = vmatpush1.bf16.msra.mxu0 %v1190
          %1394 = vmatprep.subr.bf16.mxu0 0
          %1395 = vmatpush1.bf16.msra.mxu0 %v1191
          %1396 = vmatprep.subr.bf16.mxu0 0
          %1397 = vmatpush1.bf16.msra.mxu0 %v1192
          %1398 = vmatprep.subr.bf16.mxu0 0
          %1399 = vmatpush1.bf16.msra.mxu0 %v1193
          %1400 = vmatprep.subr.bf16.mxu0 0
          %1401 = vmatpush1.bf16.msra.mxu0 %v1194
          %1402 = vmatprep.subr.bf16.mxu0 0
          %1403 = vmatpush1.bf16.msra.mxu0 %v1195
          %1404 = vmatprep.subr.bf16.mxu0 0
          %1405 = vmatpush1.bf16.msra.mxu0 %v1196
          %1406 = vmatprep.subr.bf16.mxu0 0
          %1407 = vmatpush1.bf16.msra.mxu0 %v1197
          %1408 = vmatprep.subr.bf16.mxu0 0
          %1409 = vmatpush1.bf16.msra.mxu0 %v1198
          %1410 = vmatprep.subr.bf16.mxu0 0
          %1411 = vmatpush1.bf16.msra.mxu0 %v1199
          %1412 = vmatprep.subr.bf16.mxu0 0
          %1413 = vmatpush1.bf16.msra.mxu0 %v1200
          %1414 = vmatprep.subr.bf16.mxu0 0
          %1415 = vmatpush1.bf16.msra.mxu0 %v1201
          %1416 = vmatprep.subr.bf16.mxu0 0
          %1417 = vmatpush1.bf16.msra.mxu0 %v1202
          %1418 = vmatprep.subr.bf16.mxu0 0
          %1419 = vmatpush1.bf16.msra.mxu0 %v1203
          %1420 = vmatprep.mubr.bf16.mxu0 %v748
          %1421 = vmatmul.mubr.bf16.gmra.mrb[0].mxu0 %v747
          %v1422 = vpop.f32.mrb[0].mxu0
          %v1423 = vadd.f32 %v1383, %v1422
          %v1424 = vpop.f32.mrb[0].mxu0
          %v1425 = vpop.f32.mrb[0].mxu0
          %v1426 = vpop.f32.mrb[0].mxu0
          %1427 = vdwg.mxu0
          %v1428 = vmax.f32 %v1423, 0.0
          %v1429 = vpack.c.bf16 %v1428, %v1428
          %v1430 = vld [vmem:[#allocation11] sm:$0xf]
          %v1431 = vld [vmem:[#allocation11 + $0x4] sm:$0xf]
          %v1432 = vld [vmem:[#allocation11 + $0x8] sm:$0xf]
          %v1433 = vld [vmem:[#allocation11 + $0xc] sm:$0xf]
          %v1434 = vld [vmem:[#allocation11 + $0x10] sm:$0xf]
          %v1435 = vld [vmem:[#allocation11 + $0x14] sm:$0xf]
          %v1436 = vld [vmem:[#allocation11 + $0x18] sm:$0xf]
          %v1437 = vld [vmem:[#allocation11 + $0x1c] sm:$0xf]
          %v1438 = vld [vmem:[#allocation11 + $0x20] sm:$0xf]
          %v1439 = vld [vmem:[#allocation11 + $0x24] sm:$0xf]
          %v1440 = vld [vmem:[#allocation11 + $0x28] sm:$0xf]
          %v1441 = vld [vmem:[#allocation11 + $0x2c] sm:$0xf]
          %v1442 = vld [vmem:[#allocation11 + $0x30] sm:$0xf]
          %v1443 = vld [vmem:[#allocation11 + $0x34] sm:$0xf]
          %v1444 = vld [vmem:[#allocation11 + $0x38] sm:$0xf]
          %v1445 = vld [vmem:[#allocation11 + $0x3c] sm:$0xf]
          %v1446 = vld [vmem:[%s6] sm:$0x1]
          %v1448 = vlaneseq
          %v1449 = vshrl.u32 %v1448, 7
          %v1450 = vsub.s32 0, %v1449
          %v1451 = vrot.slane %v1446, %v1450
          %v1469 = vunpack.c.l.b16 %v1430
          %v1470 = vunpack.c.l.b16 %v1431
          %v1471 = vunpack.c.l.b16 %v1432
          %v1472 = vunpack.c.l.b16 %v1433
          %v1473 = vunpack.c.l.b16 %v1434
          %v1474 = vunpack.c.l.b16 %v1435
          %v1475 = vunpack.c.l.b16 %v1436
          %v1476 = vunpack.c.l.b16 %v1437
          %v1477 = vunpack.c.l.b16 %v1438
          %v1478 = vunpack.c.l.b16 %v1439
          %v1479 = vunpack.c.l.b16 %v1440
          %v1480 = vunpack.c.l.b16 %v1441
          %v1481 = vunpack.c.l.b16 %v1442
          %v1482 = vunpack.c.l.b16 %v1443
          %v1483 = vunpack.c.l.b16 %v1444
          %v1484 = vunpack.c.l.b16 %v1445
          %v1485 = vpack.c.b16 %v1470, %v1469
          %v1486 = vpack.c.b16 %v1472, %v1471
          %v1487 = vpack.c.b16 %v1474, %v1473
          %v1488 = vpack.c.b16 %v1476, %v1475
          %v1489 = vpack.c.b16 %v1478, %v1477
          %v1490 = vpack.c.b16 %v1480, %v1479
          %v1491 = vpack.c.b16 %v1482, %v1481
          %v1492 = vpack.c.b16 %v1484, %v1483
          %1501 = vmatprep.subr.bf16.mxu0 0
          %1502 = vmatpush1.bf16.msra.mxu0 %v1485
          %1503 = vmatprep.subr.bf16.mxu0 0
          %1504 = vmatpush1.bf16.msra.mxu0 %v1486
          %1505 = vmatprep.subr.bf16.mxu0 0
          %1506 = vmatpush1.bf16.msra.mxu0 %v1487
          %1507 = vmatprep.subr.bf16.mxu0 0
          %1508 = vmatpush1.bf16.msra.mxu0 %v1488
          %1509 = vmatprep.subr.bf16.mxu0 0
          %1510 = vmatpush1.bf16.msra.mxu0 %v1489
          %1511 = vmatprep.subr.bf16.mxu0 0
          %1512 = vmatpush1.bf16.msra.mxu0 %v1490
          %1513 = vmatprep.subr.bf16.mxu0 0
          %1514 = vmatpush1.bf16.msra.mxu0 %v1491
          %1515 = vmatprep.subr.bf16.mxu0 0
          %1516 = vmatpush1.bf16.msra.mxu0 %v1492
          %1517 = vmatprep.subr.bf16.mxu0 0
          %1518 = vmatpush1.bf16.msra.mxu0 0
          %1519 = vmatprep.subr.bf16.mxu0 0
          %1520 = vmatpush1.bf16.msra.mxu0 0
          %1521 = vmatprep.subr.bf16.mxu0 0
          %1522 = vmatpush1.bf16.msra.mxu0 0
          %1523 = vmatprep.subr.bf16.mxu0 0
          %1524 = vmatpush1.bf16.msra.mxu0 0
          %1525 = vmatprep.subr.bf16.mxu0 0
          %1526 = vmatpush1.bf16.msra.mxu0 0
          %1527 = vmatprep.subr.bf16.mxu0 0
          %1528 = vmatpush1.bf16.msra.mxu0 0
          %1529 = vmatprep.subr.bf16.mxu0 0
          %1530 = vmatpush1.bf16.msra.mxu0 0
          %1531 = vmatprep.subr.bf16.mxu0 0
          %1532 = vmatpush1.bf16.msra.mxu0 0
          %1533 = vmatprep.mubr.bf16.mxu0 0
          %1534 = vmatmul.mubr.bf16.gmra.mrb[0].mxu0 %v1429
          %v1535 = vpop.f32.mrb[0].mxu0
          %v1536 = vadd.f32 %v1451, %v1535
          %v1537 = vpop.f32.mrb[0].mxu0
          %v1538 = vpop.f32.mrb[0].mxu0
          %v1539 = vpop.f32.mrb[0].mxu0
          %1540 = vdwg.mxu0
          %1541 = vst [vmem:[#allocation12] sm:$0xff] %v1536
        $region76: #{tpu_custom_call.1} parent=47 // pred_fallthru
          _
        // Predicated region
        $region77: #{tpu_custom_call.1} parent=47 // pred_check
          %p1542 = pneg %p208
        $region78: #{tpu_custom_call.1} parent=47 // pred_check_branch
          %1544 = sbr.rel (%p1542) target = $region80
        $region79: #{tpu_custom_call.1} parent=47 // pred_region
          %s1546 = ssub.s32 128, 128
          %1547 = vsyncadd [#allocation5], %s1546
          %s1548 = smul.addr %s28, 128
          %s1549 = scalar_lea.hbm %s7, %s1548
          %s1551 = sshll.u32 [#allocation12], 4
          %s1552 = int_to_ptr.vmem [resolvable:$true] %s1551
          %1554 = dma.vmem_to_hbm [thread:$0]  %s1552, 128, %s1549, [#allocation5]
        $region80: #{tpu_custom_call.1} parent=47 // pred_fallthru
          _
        // Predicated region
        $region81: #{tpu_custom_call.1} parent=47 // pred_check
          %p1555 = pneg %p208
        $region82: #{tpu_custom_call.1} parent=47 // pred_check_branch
          %1557 = sbr.rel (%p1555) target = $region84
        $region83: #{tpu_custom_call.1} parent=47 // pred_region
          %1558 = dma.done [#allocation5], 128
        $region84: #{tpu_custom_call.1} parent=47 // pred_fallthru
          _
      $region48: #{tpu_custom_call.1} parent=5 // pred_fallthru
        _
      %p1559 = scmp.le.s32.totalorder 2, %s19
      // Predicated region
      $region85: #{tpu_custom_call.1} parent=5 // pred_check
        %p1560 = pneg %p1559
      $region86: #{tpu_custom_call.1} parent=5 // pred_check_branch
        %1562 = sbr.rel (%p1560) target = $region88
      $region87: #{tpu_custom_call.1} parent=5 // pred_region
        %s1563 = ssub.s32 %s19, 2
      $region88: #{tpu_custom_call.1} parent=5 // pred_fallthru
        _
    $region6: #{tpu_custom_call.1} parent=1 // loop_footer
      %s23 = sadd.s32 1, %s19
    $region7: #{tpu_custom_call.1} parent=1 // loop_footer_branch
      %18 = sbr.rel target = $region3
    $region8: #{tpu_custom_call.1} parent=1 // loop_exit
      _
    %1564 = vsyncpa [#allocation4], 1
    %s1565 = scalar_lea.sflag [#allocation4], 1
    %1566 = vsyncpa %s1565, 1
    %1567 = vsyncpa [#allocation7], 1
    %1568 = vsyncpa [#allocation10], 1
    %1569 = vsyncpa [#allocation5], 1
    %s1570 = scalar_lea.sflag [#allocation5], 1
    %1571 = vsyncpa %s1570, 1

</llo_original>
